<compile_context>
chip_gen: v6e
topology: v6e:2x2x1
jax: 0.10.0
libtpu: 0.0.40
codegen_flags: <defaults>
</compile_context>

<pallas_src>
from functools import partial

import jax
import jax.numpy as jnp
from jax.experimental import pallas as pl
from jax.experimental.pallas import tpu as pltpu


_TAPS = tuple((kh - 1, kw - 1) for kh in range(3) for kw in range(3))


# ------------------------------ fused kernel --------------------------------

def fused_forward_kernel(width, bt,
                         x_ref, mask_ref, w1_ref, b1_ref, w2_ref, b2_ref,
                         fcw_ref, fcb_ref,
                         conv1_ref, relu1_ref, conv2_ref, add_ref,
                         relu2_ref, fc_ref,
                         p1_scr, p2_scr):
    """One block of `bt` batch samples per grid step. Everything stays on-chip.

    x_ref   : (bt, Cin, HW)   raw NCHW-flat input (im2col built in-kernel)
    mask_ref: (9, HW)         precomputed boundary-validity masks (constant)
    w1_ref  : (C1, 9*Cin)     folded conv1 weight (tap-major K)
    b1_ref  : (C1, 1)
    w2_ref  : (C2, 9*C1)      folded conv2 weight
    b2_ref  : (C2, 1)
    fcw_ref : (C2*HW, D)      fc weight, NCHW-flatten K-major
    fcb_ref : (1, D)
    p1_scr  : (9*Cin, HW)     VMEM patch slab for conv1
    p2_scr  : (9*C1, HW)      VMEM patch slab for conv2
    """
    hw = x_ref.shape[2]
    cin = x_ref.shape[1]
    c1 = w1_ref.shape[0]
    c2 = w2_ref.shape[0]

    # Hoisted constants: fetched once per grid step, reused for all bt samples.
    masks = mask_ref[...]
    w1 = w1_ref[...]
    b1 = b1_ref[...]
    w2 = w2_ref[...]
    b2 = b2_ref[...]
    fcw = fcw_ref[...]
    fcb = fcb_ref[...]

    def build_patches(act, chans, scr):
        # Stream each shifted+masked tap straight into the VMEM scratch slab so
        # only a couple of vregs stay live (no 9-piece concat). The wrap-around
        # positions produced by the mod-HW roll are exactly the ones the
        # precomputed mask zeroes.
        for t, (dh, dw) in enumerate(_TAPS):
            off = dh * width + dw
            if off == 0:
                tap = act                                   # center tap: no shift/mask
            else:
                shifted = pltpu.roll(act, shift=(-off) % hw, axis=1)
                tap = shifted * masks[t:t + 1, :]
            scr[t * chans:(t + 1) * chans, :] = tap

    for b in range(bt):          # static unroll over the samples of this block
        xb = x_ref[b]            # (Cin, HW)

        # ---- conv1: in-kernel im2col + single MXU matmul (K = 9*Cin) ----
        build_patches(xb, cin, p1_scr)
        conv1 = jnp.dot(w1, p1_scr[...],
                        preferred_element_type=jnp.float32) + b1
        conv1_ref[b] = conv1

        # ---- relu1 (fused epilogue) ----
        relu1 = jnp.maximum(conv1, 0.0)
        relu1_ref[b] = relu1

        # ---- conv2: halo built from the VMEM-resident relu1 (K = 9*C1) ----
        build_patches(relu1, c1, p2_scr)
        conv2 = jnp.dot(w2, p2_scr[...],
                        preferred_element_type=jnp.float32) + b2
        conv2_ref[b] = conv2

        # ---- residual add + relu2 (fused epilogues) ----
        added = relu1 + conv2
        add_ref[b] = added
        relu2 = jnp.maximum(added, 0.0)
        relu2_ref[b] = relu2

        # ---- fc: ONE matmul over the NCHW-flattened activation ----
        flat = jnp.concatenate([relu2[c:c + 1, :] for c in range(c2)], axis=1)
        fc_ref[b] = jnp.dot(flat, fcw,
                            preferred_element_type=jnp.float32) + fcb


def _pick_block_batch(n):
    """Samples per grid step: amortize per-step overhead but keep >=2 grid
    steps when n >= 2 so v7x's two TensorCores both get work."""
    if n <= 1:
        return 1
    bt = max(1, min(8, n // 2))
    while n % bt:
        bt -= 1
    return bt


def _fused_pallas(x3, mask9, w1f, b1c, w2f, b2c, fcw, fcb,
                  *, n, bt, c1, c2, hw, d_out, width):
    cin = x3.shape[1]

    def act_spec(ch):
        return pl.BlockSpec((bt, ch, hw), lambda i: (i, 0, 0))

    out_shapes = (
        jax.ShapeDtypeStruct((n, c1, hw), jnp.float32),    # conv1
        jax.ShapeDtypeStruct((n, c1, hw), jnp.float32),    # relu1
        jax.ShapeDtypeStruct((n, c2, hw), jnp.float32),    # conv2
        jax.ShapeDtypeStruct((n, c2, hw), jnp.float32),    # add
        jax.ShapeDtypeStruct((n, c2, hw), jnp.float32),    # relu2
        jax.ShapeDtypeStruct((n, 1, d_out), jnp.float32),  # fc
    )
    out_specs = (
        act_spec(c1), act_spec(c1), act_spec(c2), act_spec(c2), act_spec(c2),
        pl.BlockSpec((bt, 1, d_out), lambda i: (i, 0, 0)),
    )
    in_specs = [
        pl.BlockSpec((bt, cin, hw), lambda i: (i, 0, 0)),   # raw input block
        pl.BlockSpec(mask9.shape, lambda i: (0, 0)),        # constant masks
        pl.BlockSpec(w1f.shape, lambda i: (0, 0)),          # constant weights ->
        pl.BlockSpec(b1c.shape, lambda i: (0, 0)),          # fetched once
        pl.BlockSpec(w2f.shape, lambda i: (0, 0)),
        pl.BlockSpec(b2c.shape, lambda i: (0, 0)),
        pl.BlockSpec(fcw.shape, lambda i: (0, 0)),
        pl.BlockSpec(fcb.shape, lambda i: (0, 0)),
    ]
    return pl.pallas_call(
        partial(fused_forward_kernel, width, bt),
        out_shape=out_shapes,
        grid=(n // bt,),
        in_specs=in_specs,
        out_specs=out_specs,
        scratch_shapes=[pltpu.VMEM((9 * cin, hw), jnp.float32),
                        pltpu.VMEM((9 * c1, hw), jnp.float32)],
        compiler_params=pltpu.CompilerParams(
            dimension_semantics=("parallel",)),   # batch axis -> both v7x TCs
    )(x3, mask9, w1f, b1c, w2f, b2c, fcw, fcb)


# --------------------------- Network.forward --------------------------------

@jax.jit
def network_forward(x, folded):
    """Mirrors Network.forward(): the whole element DAG runs in one fused
    Pallas kernel; the returned dict is the `values` dict of every element."""
    n, cin, h, w = x.shape
    hw = h * w
    c1 = folded['w1f'].shape[0]
    c2 = folded['w2f'].shape[0]
    d_out = folded['fcb'].shape[1]
    bt = _pick_block_batch(n)

    # Free row-major collapse of the NCHW input to (N, Cin, HW); all im2col
    # work (for both convs) happens inside the kernel now.
    x3 = x.reshape(n, cin, hw)

    conv1, relu1, conv2, added, relu2, fc = _fused_pallas(
        x3, folded['mask9'], folded['w1f'], folded['b1c'],
        folded['w2f'], folded['b2c'], folded['fcw'], folded['fcb'],
        n=n, bt=bt, c1=c1, c2=c2, hw=hw, d_out=d_out, width=w)

    return {
        '/conv1':   conv1.reshape(n, c1, h, w),
        '/relu1':   relu1.reshape(n, c1, h, w),
        '/conv2':   conv2.reshape(n, c2, h, w),
        '/add':     added.reshape(n, c2, h, w),
        '/relu2':   relu2.reshape(n, c2, h, w),
        '/flatten': relu2.reshape(n, c2 * hw),              # NCHW-flatten order
        '/fc':      fc.reshape(n, d_out),
    }


# ------------------------------ parameters ----------------------------------

def init_params(key, c_in=4, c1=8, c2=8, h=16, w=16, d_out=32):
    k1, k2, k3, k4, k5, k6 = jax.random.split(key, 6)
    return {
        # PyTorch conv weight layout: (Cout, Cin, kh, kw)
        'conv1_w': 0.1 * jax.random.normal(k1, (c1, c_in, 3, 3), jnp.float32),
        'conv1_b': 0.1 * jax.random.normal(k2, (c1,), jnp.float32),
        'conv2_w': 0.1 * jax.random.normal(k3, (c2, c1, 3, 3), jnp.float32),
        'conv2_b': 0.1 * jax.random.normal(k4, (c2,), jnp.float32),
        # PyTorch linear weight layout: (out_features, in_features)
        'fc_w': 0.02 * jax.random.normal(k5, (d_out, c2 * h * w), jnp.float32),
        'fc_b': 0.02 * jax.random.normal(k6, (d_out,), jnp.float32),
    }


def fold_params(params, h, w):
    """One-time repack of PyTorch-layout weights into kernel layouts, plus the
    precomputed boundary-validity masks (they depend only on H, W)."""
    c1, cin = params['conv1_w'].shape[:2]
    c2 = params['conv2_w'].shape[0]
    d_out = params['fc_w'].shape[0]
    hw = h * w

    s = jnp.arange(hw, dtype=jnp.int32)
    row, col = s // w, s % w
    masks = []
    for kh in range(3):
        for kw in range(3):
            dh, dw = kh - 1, kw - 1
            valid = ((row + dh >= 0) & (row + dh < h) &
                     (col + dw >= 0) & (col + dw < w))
            masks.append(valid.astype(jnp.float32))
    mask9 = jnp.stack(masks, axis=0)                       # (9, HW)

    return {
        # folded conv weights: [Cout, (kh*3+kw)*Cin + ci]
        'w1f': jnp.transpose(params['conv1_w'], (0, 2, 3, 1)).reshape(c1, 9 * cin),
        'b1c': params['conv1_b'].reshape(c1, 1),
        'w2f': jnp.transpose(params['conv2_w'], (0, 2, 3, 1)).reshape(c2, 9 * c1),
        'b2c': params['conv2_b'].reshape(c2, 1),
        # fc weight as (C2*HW, D): NCHW-flatten K-major -> one in-kernel matmul
        'fcw': jnp.transpose(params['fc_w']),
        'fcb': params['fc_b'].reshape(1, d_out),
        'mask9': mask9,
    }


# ------------------------- pure-JAX reference --------------------------------

def reference_forward(x, params):
    dn = ('NCHW', 'OIHW', 'NCHW')
    hp = jax.lax.Precision.HIGHEST
    conv1 = jax.lax.conv_general_dilated(
        x, params['conv1_w'], (1, 1), ((1, 1), (1, 1)),
        dimension_numbers=dn, precision=hp) + params['conv1_b'][None, :, None, None]
    relu1 = jnp.maximum(conv1, 0.0)
    conv2 = jax.lax.conv_general_dilated(
        relu1, params['conv2_w'], (1, 1), ((1, 1), (1, 1)),
        dimension_numbers=dn, precision=hp) + params['conv2_b'][None, :, None, None]
    added = relu1 + conv2
    relu2 = jnp.maximum(added, 0.0)
    flat = relu2.reshape(x.shape[0], -1)
    fc = jnp.dot(flat, params['fc_w'].T, precision=hp) + params['fc_b']
    return {'/conv1': conv1, '/relu1': relu1, '/conv2': conv2, '/add': added,
            '/relu2': relu2, '/flatten': flat, '/fc': fc}


# TODO(synk): Network's serialization / build / load_weights / get_part_model
# machinery has no Pallas equivalent; only the forward dataflow (the `values`
# dict) is implemented here.

if __name__ == "__main__":
    key = jax.random.PRNGKey(0)
    x = jax.random.normal(key, (2, 4, 16, 16), jnp.float32)   # NCHW input
    params = init_params(jax.random.PRNGKey(42))
    folded = fold_params(params, 16, 16)    # one-time repack, outside hot path

    values = network_forward(x, folded)
    values = jax.block_until_ready(values)

    # shape checks (same graph as before)
    assert values['/conv1'].shape == (2, 8, 16, 16)
    assert values['/add'].shape == (2, 8, 16, 16)
    assert values['/flatten'].shape == (2, 8 * 16 * 16)
    assert values['/fc'].shape == (2, 32)

    # numerical check against a pure-JAX reference of the same DAG
    # (tightened 4x vs. before; leaves headroom for MXU pass rounding)
    ref = reference_forward(x, params)
    for k in values:
        assert jnp.allclose(values[k], ref[k], rtol=5e-3, atol=5e-3), k

    print("KERNEL_OK")
</pallas_src>

<mosaic_0001>
module attributes {stable_mosaic.version = 11 : i64} {
  func.func @fused_forward_kernel(%arg0: i32, %arg1: memref<1x4x256xf32, #tpu.memory_space<vmem>>, %arg2: memref<9x256xf32, #tpu.memory_space<vmem>>, %arg3: memref<8x36xf32, #tpu.memory_space<vmem>>, %arg4: memref<8x1xf32, #tpu.memory_space<vmem>>, %arg5: memref<8x72xf32, #tpu.memory_space<vmem>>, %arg6: memref<8x1xf32, #tpu.memory_space<vmem>>, %arg7: memref<2048x32xf32, #tpu.memory_space<vmem>>, %arg8: memref<1x32xf32, #tpu.memory_space<vmem>>, %arg9: memref<1x8x256xf32, #tpu.memory_space<vmem>>, %arg10: memref<1x8x256xf32, #tpu.memory_space<vmem>>, %arg11: memref<1x8x256xf32, #tpu.memory_space<vmem>>, %arg12: memref<1x8x256xf32, #tpu.memory_space<vmem>>, %arg13: memref<1x8x256xf32, #tpu.memory_space<vmem>>, %arg14: memref<1x1x32xf32, #tpu.memory_space<vmem>>, %arg15: memref<36x256xf32, #tpu.memory_space<vmem>>, %arg16: memref<72x256xf32, #tpu.memory_space<vmem>>) attributes {dimension_semantics = [#tpu.dimension_semantics<parallel>], iteration_bounds = array<i64: 2>, scalar_prefetch = 0 : i64, scratch_operands = 2 : i64, tpu.core_type = #tpu.core_type<tc>, window_params = [{transform_indices = @transform_0, window_bounds = array<i64: 1, 4, 256>}, {pipeline_mode = #tpu.pipeline_mode<synchronous>, transform_indices = @transform_1, window_bounds = array<i64: 9, 256>}, {pipeline_mode = #tpu.pipeline_mode<synchronous>, transform_indices = @transform_2, window_bounds = array<i64: 8, 36>}, {pipeline_mode = #tpu.pipeline_mode<synchronous>, transform_indices = @transform_3, window_bounds = array<i64: 8, 1>}, {pipeline_mode = #tpu.pipeline_mode<synchronous>, transform_indices = @transform_4, window_bounds = array<i64: 8, 72>}, {pipeline_mode = #tpu.pipeline_mode<synchronous>, transform_indices = @transform_5, window_bounds = array<i64: 8, 1>}, {pipeline_mode = #tpu.pipeline_mode<synchronous>, transform_indices = @transform_6, window_bounds = array<i64: 2048, 32>}, {pipeline_mode = #tpu.pipeline_mode<synchronous>, transform_indices = @transform_7, window_bounds = array<i64: 1, 32>}, {transform_indices = @transform_8, window_bounds = array<i64: 1, 8, 256>}, {transform_indices = @transform_9, window_bounds = array<i64: 1, 8, 256>}, {transform_indices = @transform_10, window_bounds = array<i64: 1, 8, 256>}, {transform_indices = @transform_11, window_bounds = array<i64: 1, 8, 256>}, {transform_indices = @transform_12, window_bounds = array<i64: 1, 8, 256>}, {transform_indices = @transform_13, window_bounds = array<i64: 1, 1, 32>}]} {
    %c0 = arith.constant 0 : index
    %c0_0 = arith.constant 0 : index
    %0 = vector.load %arg2[%c0, %c0_0] : memref<9x256xf32, #tpu.memory_space<vmem>>, vector<9x256xf32>
    %c0_1 = arith.constant 0 : index
    %c0_2 = arith.constant 0 : index
    %1 = vector.load %arg3[%c0_1, %c0_2] : memref<8x36xf32, #tpu.memory_space<vmem>>, vector<8x36xf32>
    %c0_3 = arith.constant 0 : index
    %c0_4 = arith.constant 0 : index
    %2 = vector.load %arg4[%c0_3, %c0_4] : memref<8x1xf32, #tpu.memory_space<vmem>>, vector<8x1xf32>
    %c0_5 = arith.constant 0 : index
    %c0_6 = arith.constant 0 : index
    %3 = vector.load %arg5[%c0_5, %c0_6] : memref<8x72xf32, #tpu.memory_space<vmem>>, vector<8x72xf32>
    %c0_7 = arith.constant 0 : index
    %c0_8 = arith.constant 0 : index
    %4 = vector.load %arg6[%c0_7, %c0_8] : memref<8x1xf32, #tpu.memory_space<vmem>>, vector<8x1xf32>
    %c0_9 = arith.constant 0 : index
    %c0_10 = arith.constant 0 : index
    %5 = vector.load %arg7[%c0_9, %c0_10] : memref<2048x32xf32, #tpu.memory_space<vmem>>, vector<2048x32xf32>
    %c0_11 = arith.constant 0 : index
    %c0_12 = arith.constant 0 : index
    %6 = vector.load %arg8[%c0_11, %c0_12] : memref<1x32xf32, #tpu.memory_space<vmem>>, vector<1x32xf32>
    %c0_13 = arith.constant 0 : index
    %c0_14 = arith.constant 0 : index
    %c0_15 = arith.constant 0 : index
    %7 = vector.load %arg1[%c0_13, %c0_14, %c0_15] : memref<1x4x256xf32, #tpu.memory_space<vmem>>, vector<1x4x256xf32>
    %8 = vector.shape_cast %7 : vector<1x4x256xf32> to vector<4x256xf32>
    %c17_i32 = arith.constant 17 : i32
    %9 = tpu.dynamic_rotate %8 by %c17_i32 dim 1 : vector<4x256xf32>, i32 -> vector<4x256xf32>
    %10 = vector.extract_strided_slice %0 {offsets = [0, 0], sizes = [1, 256], strides = [1, 1]} : vector<9x256xf32> to vector<1x256xf32>
    %11 = vector.broadcast %10 : vector<1x256xf32> to vector<4x256xf32>
    %12 = arith.mulf %9, %11 : vector<4x256xf32>
    %c0_16 = arith.constant 0 : index
    %c0_17 = arith.constant 0 : index
    %13 = vector.load %arg15[%c0_16, %c0_17] : memref<36x256xf32, #tpu.memory_space<vmem>>, vector<4x256xf32>
    tpu.vector_store %arg15[%c0_16, %c0_17], %12 {strides = array<i32>} : memref<36x256xf32, #tpu.memory_space<vmem>>, vector<4x256xf32>,
    %c16_i32 = arith.constant 16 : i32
    %14 = tpu.dynamic_rotate %8 by %c16_i32 dim 1 : vector<4x256xf32>, i32 -> vector<4x256xf32>
    %15 = vector.extract_strided_slice %0 {offsets = [1, 0], sizes = [1, 256], strides = [1, 1]} : vector<9x256xf32> to vector<1x256xf32>
    %16 = vector.broadcast %15 : vector<1x256xf32> to vector<4x256xf32>
    %17 = arith.mulf %14, %16 : vector<4x256xf32>
    %c4 = arith.constant 4 : index
    %c0_18 = arith.constant 0 : index
    %18 = vector.load %arg15[%c4, %c0_18] : memref<36x256xf32, #tpu.memory_space<vmem>>, vector<4x256xf32>
    tpu.vector_store %arg15[%c4, %c0_18], %17 {strides = array<i32>} : memref<36x256xf32, #tpu.memory_space<vmem>>, vector<4x256xf32>,
    %c15_i32 = arith.constant 15 : i32
    %19 = tpu.dynamic_rotate %8 by %c15_i32 dim 1 : vector<4x256xf32>, i32 -> vector<4x256xf32>
    %20 = vector.extract_strided_slice %0 {offsets = [2, 0], sizes = [1, 256], strides = [1, 1]} : vector<9x256xf32> to vector<1x256xf32>
    %21 = vector.broadcast %20 : vector<1x256xf32> to vector<4x256xf32>
    %22 = arith.mulf %19, %21 : vector<4x256xf32>
    %c8 = arith.constant 8 : index
    %c0_19 = arith.constant 0 : index
    %23 = vector.load %arg15[%c8, %c0_19] : memref<36x256xf32, #tpu.memory_space<vmem>>, vector<4x256xf32>
    tpu.vector_store %arg15[%c8, %c0_19], %22 {strides = array<i32>} : memref<36x256xf32, #tpu.memory_space<vmem>>, vector<4x256xf32>,
    %c1_i32 = arith.constant 1 : i32
    %24 = tpu.dynamic_rotate %8 by %c1_i32 dim 1 : vector<4x256xf32>, i32 -> vector<4x256xf32>
    %25 = vector.extract_strided_slice %0 {offsets = [3, 0], sizes = [1, 256], strides = [1, 1]} : vector<9x256xf32> to vector<1x256xf32>
    %26 = vector.broadcast %25 : vector<1x256xf32> to vector<4x256xf32>
    %27 = arith.mulf %24, %26 : vector<4x256xf32>
    %c12 = arith.constant 12 : index
    %c0_20 = arith.constant 0 : index
    %28 = vector.load %arg15[%c12, %c0_20] : memref<36x256xf32, #tpu.memory_space<vmem>>, vector<4x256xf32>
    tpu.vector_store %arg15[%c12, %c0_20], %27 {strides = array<i32>} : memref<36x256xf32, #tpu.memory_space<vmem>>, vector<4x256xf32>,
    %c16 = arith.constant 16 : index
    %c0_21 = arith.constant 0 : index
    %29 = vector.load %arg15[%c16, %c0_21] : memref<36x256xf32, #tpu.memory_space<vmem>>, vector<4x256xf32>
    tpu.vector_store %arg15[%c16, %c0_21], %8 {strides = array<i32>} : memref<36x256xf32, #tpu.memory_space<vmem>>, vector<4x256xf32>,
    %c255_i32 = arith.constant 255 : i32
    %30 = tpu.dynamic_rotate %8 by %c255_i32 dim 1 : vector<4x256xf32>, i32 -> vector<4x256xf32>
    %31 = vector.extract_strided_slice %0 {offsets = [5, 0], sizes = [1, 256], strides = [1, 1]} : vector<9x256xf32> to vector<1x256xf32>
    %32 = vector.broadcast %31 : vector<1x256xf32> to vector<4x256xf32>
    %33 = arith.mulf %30, %32 : vector<4x256xf32>
    %c20 = arith.constant 20 : index
    %c0_22 = arith.constant 0 : index
    %34 = vector.load %arg15[%c20, %c0_22] : memref<36x256xf32, #tpu.memory_space<vmem>>, vector<4x256xf32>
    tpu.vector_store %arg15[%c20, %c0_22], %33 {strides = array<i32>} : memref<36x256xf32, #tpu.memory_space<vmem>>, vector<4x256xf32>,
    %c241_i32 = arith.constant 241 : i32
    %35 = tpu.dynamic_rotate %8 by %c241_i32 dim 1 : vector<4x256xf32>, i32 -> vector<4x256xf32>
    %36 = vector.extract_strided_slice %0 {offsets = [6, 0], sizes = [1, 256], strides = [1, 1]} : vector<9x256xf32> to vector<1x256xf32>
    %37 = vector.broadcast %36 : vector<1x256xf32> to vector<4x256xf32>
    %38 = arith.mulf %35, %37 : vector<4x256xf32>
    %c24 = arith.constant 24 : index
    %c0_23 = arith.constant 0 : index
    %39 = vector.load %arg15[%c24, %c0_23] : memref<36x256xf32, #tpu.memory_space<vmem>>, vector<4x256xf32>
    tpu.vector_store %arg15[%c24, %c0_23], %38 {strides = array<i32>} : memref<36x256xf32, #tpu.memory_space<vmem>>, vector<4x256xf32>,
    %c240_i32 = arith.constant 240 : i32
    %40 = tpu.dynamic_rotate %8 by %c240_i32 dim 1 : vector<4x256xf32>, i32 -> vector<4x256xf32>
    %41 = vector.extract_strided_slice %0 {offsets = [7, 0], sizes = [1, 256], strides = [1, 1]} : vector<9x256xf32> to vector<1x256xf32>
    %42 = vector.broadcast %41 : vector<1x256xf32> to vector<4x256xf32>
    %43 = arith.mulf %40, %42 : vector<4x256xf32>
    %c28 = arith.constant 28 : index
    %c0_24 = arith.constant 0 : index
    %44 = vector.load %arg15[%c28, %c0_24] : memref<36x256xf32, #tpu.memory_space<vmem>>, vector<4x256xf32>
    tpu.vector_store %arg15[%c28, %c0_24], %43 {strides = array<i32>} : memref<36x256xf32, #tpu.memory_space<vmem>>, vector<4x256xf32>,
    %c239_i32 = arith.constant 239 : i32
    %45 = tpu.dynamic_rotate %8 by %c239_i32 dim 1 : vector<4x256xf32>, i32 -> vector<4x256xf32>
    %46 = vector.extract_strided_slice %0 {offsets = [8, 0], sizes = [1, 256], strides = [1, 1]} : vector<9x256xf32> to vector<1x256xf32>
    %47 = vector.broadcast %46 : vector<1x256xf32> to vector<4x256xf32>
    %48 = arith.mulf %45, %47 : vector<4x256xf32>
    %c32 = arith.constant 32 : index
    %c0_25 = arith.constant 0 : index
    %49 = vector.load %arg15[%c32, %c0_25] : memref<36x256xf32, #tpu.memory_space<vmem>>, vector<4x256xf32>
    tpu.vector_store %arg15[%c32, %c0_25], %48 {strides = array<i32>} : memref<36x256xf32, #tpu.memory_space<vmem>>, vector<4x256xf32>,
    %c0_26 = arith.constant 0 : index
    %c0_27 = arith.constant 0 : index
    %50 = vector.load %arg15[%c0_26, %c0_27] : memref<36x256xf32, #tpu.memory_space<vmem>>, vector<36x256xf32>
    %cst = arith.constant dense<0.000000e+00> : vector<8x256xf32>
    %51 = tpu.matmul %1, %50, %cst {dimension_numbers = #tpu.dot_dimension_numbers<[1], [0], [0], [1], [0, 0, 1, 1], [], []>} : vector<8x36xf32>, vector<36x256xf32>, vector<8x256xf32> -> vector<8x256xf32>
    %52 = vector.broadcast %2 : vector<8x1xf32> to vector<8x256xf32>
    %53 = arith.addf %51, %52 : vector<8x256xf32>
    %c0_28 = arith.constant 0 : index
    %c0_29 = arith.constant 0 : index
    %c0_30 = arith.constant 0 : index
    %54 = vector.load %arg9[%c0_28, %c0_29, %c0_30] : memref<1x8x256xf32, #tpu.memory_space<vmem>>, vector<1x8x256xf32>
    %55 = vector.shape_cast %54 : vector<1x8x256xf32> to vector<8x256xf32>
    %56 = vector.shape_cast %53 : vector<8x256xf32> to vector<1x8x256xf32>
    tpu.vector_store %arg9[%c0_28, %c0_29, %c0_30], %56 {strides = array<i32>} : memref<1x8x256xf32, #tpu.memory_space<vmem>>, vector<1x8x256xf32>,
    %cst_31 = arith.constant 0.000000e+00 : f32
    %57 = vector.broadcast %cst_31 : f32 to vector<8x256xf32>
    %58 = arith.maximumf %53, %57 : vector<8x256xf32>
    %c0_32 = arith.constant 0 : index
    %c0_33 = arith.constant 0 : index
    %c0_34 = arith.constant 0 : index
    %59 = vector.load %arg10[%c0_32, %c0_33, %c0_34] : memref<1x8x256xf32, #tpu.memory_space<vmem>>, vector<1x8x256xf32>
    %60 = vector.shape_cast %59 : vector<1x8x256xf32> to vector<8x256xf32>
    %61 = vector.shape_cast %58 : vector<8x256xf32> to vector<1x8x256xf32>
    tpu.vector_store %arg10[%c0_32, %c0_33, %c0_34], %61 {strides = array<i32>} : memref<1x8x256xf32, #tpu.memory_space<vmem>>, vector<1x8x256xf32>,
    %c17_i32_35 = arith.constant 17 : i32
    %62 = tpu.dynamic_rotate %58 by %c17_i32_35 dim 1 : vector<8x256xf32>, i32 -> vector<8x256xf32>
    %63 = vector.extract_strided_slice %0 {offsets = [0, 0], sizes = [1, 256], strides = [1, 1]} : vector<9x256xf32> to vector<1x256xf32>
    %64 = vector.broadcast %63 : vector<1x256xf32> to vector<8x256xf32>
    %65 = arith.mulf %62, %64 : vector<8x256xf32>
    %c0_36 = arith.constant 0 : index
    %c0_37 = arith.constant 0 : index
    %66 = vector.load %arg16[%c0_36, %c0_37] : memref<72x256xf32, #tpu.memory_space<vmem>>, vector<8x256xf32>
    tpu.vector_store %arg16[%c0_36, %c0_37], %65 {strides = array<i32>} : memref<72x256xf32, #tpu.memory_space<vmem>>, vector<8x256xf32>,
    %c16_i32_38 = arith.constant 16 : i32
    %67 = tpu.dynamic_rotate %58 by %c16_i32_38 dim 1 : vector<8x256xf32>, i32 -> vector<8x256xf32>
    %68 = vector.extract_strided_slice %0 {offsets = [1, 0], sizes = [1, 256], strides = [1, 1]} : vector<9x256xf32> to vector<1x256xf32>
    %69 = vector.broadcast %68 : vector<1x256xf32> to vector<8x256xf32>
    %70 = arith.mulf %67, %69 : vector<8x256xf32>
    %c8_39 = arith.constant 8 : index
    %c0_40 = arith.constant 0 : index
    %71 = vector.load %arg16[%c8_39, %c0_40] : memref<72x256xf32, #tpu.memory_space<vmem>>, vector<8x256xf32>
    tpu.vector_store %arg16[%c8_39, %c0_40], %70 {strides = array<i32>} : memref<72x256xf32, #tpu.memory_space<vmem>>, vector<8x256xf32>,
    %c15_i32_41 = arith.constant 15 : i32
    %72 = tpu.dynamic_rotate %58 by %c15_i32_41 dim 1 : vector<8x256xf32>, i32 -> vector<8x256xf32>
    %73 = vector.extract_strided_slice %0 {offsets = [2, 0], sizes = [1, 256], strides = [1, 1]} : vector<9x256xf32> to vector<1x256xf32>
    %74 = vector.broadcast %73 : vector<1x256xf32> to vector<8x256xf32>
    %75 = arith.mulf %72, %74 : vector<8x256xf32>
    %c16_42 = arith.constant 16 : index
    %c0_43 = arith.constant 0 : index
    %76 = vector.load %arg16[%c16_42, %c0_43] : memref<72x256xf32, #tpu.memory_space<vmem>>, vector<8x256xf32>
    tpu.vector_store %arg16[%c16_42, %c0_43], %75 {strides = array<i32>} : memref<72x256xf32, #tpu.memory_space<vmem>>, vector<8x256xf32>,
    %c1_i32_44 = arith.constant 1 : i32
    %77 = tpu.dynamic_rotate %58 by %c1_i32_44 dim 1 : vector<8x256xf32>, i32 -> vector<8x256xf32>
    %78 = vector.extract_strided_slice %0 {offsets = [3, 0], sizes = [1, 256], strides = [1, 1]} : vector<9x256xf32> to vector<1x256xf32>
    %79 = vector.broadcast %78 : vector<1x256xf32> to vector<8x256xf32>
    %80 = arith.mulf %77, %79 : vector<8x256xf32>
    %c24_45 = arith.constant 24 : index
    %c0_46 = arith.constant 0 : index
    %81 = vector.load %arg16[%c24_45, %c0_46] : memref<72x256xf32, #tpu.memory_space<vmem>>, vector<8x256xf32>
    tpu.vector_store %arg16[%c24_45, %c0_46], %80 {strides = array<i32>} : memref<72x256xf32, #tpu.memory_space<vmem>>, vector<8x256xf32>,
    %c32_47 = arith.constant 32 : index
    %c0_48 = arith.constant 0 : index
    %82 = vector.load %arg16[%c32_47, %c0_48] : memref<72x256xf32, #tpu.memory_space<vmem>>, vector<8x256xf32>
    tpu.vector_store %arg16[%c32_47, %c0_48], %58 {strides = array<i32>} : memref<72x256xf32, #tpu.memory_space<vmem>>, vector<8x256xf32>,
    %c255_i32_49 = arith.constant 255 : i32
    %83 = tpu.dynamic_rotate %58 by %c255_i32_49 dim 1 : vector<8x256xf32>, i32 -> vector<8x256xf32>
    %84 = vector.extract_strided_slice %0 {offsets = [5, 0], sizes = [1, 256], strides = [1, 1]} : vector<9x256xf32> to vector<1x256xf32>
    %85 = vector.broadcast %84 : vector<1x256xf32> to vector<8x256xf32>
    %86 = arith.mulf %83, %85 : vector<8x256xf32>
    %c40 = arith.constant 40 : index
    %c0_50 = arith.constant 0 : index
    %87 = vector.load %arg16[%c40, %c0_50] : memref<72x256xf32, #tpu.memory_space<vmem>>, vector<8x256xf32>
    tpu.vector_store %arg16[%c40, %c0_50], %86 {strides = array<i32>} : memref<72x256xf32, #tpu.memory_space<vmem>>, vector<8x256xf32>,
    %c241_i32_51 = arith.constant 241 : i32
    %88 = tpu.dynamic_rotate %58 by %c241_i32_51 dim 1 : vector<8x256xf32>, i32 -> vector<8x256xf32>
    %89 = vector.extract_strided_slice %0 {offsets = [6, 0], sizes = [1, 256], strides = [1, 1]} : vector<9x256xf32> to vector<1x256xf32>
    %90 = vector.broadcast %89 : vector<1x256xf32> to vector<8x256xf32>
    %91 = arith.mulf %88, %90 : vector<8x256xf32>
    %c48 = arith.constant 48 : index
    %c0_52 = arith.constant 0 : index
    %92 = vector.load %arg16[%c48, %c0_52] : memref<72x256xf32, #tpu.memory_space<vmem>>, vector<8x256xf32>
    tpu.vector_store %arg16[%c48, %c0_52], %91 {strides = array<i32>} : memref<72x256xf32, #tpu.memory_space<vmem>>, vector<8x256xf32>,
    %c240_i32_53 = arith.constant 240 : i32
    %93 = tpu.dynamic_rotate %58 by %c240_i32_53 dim 1 : vector<8x256xf32>, i32 -> vector<8x256xf32>
    %94 = vector.extract_strided_slice %0 {offsets = [7, 0], sizes = [1, 256], strides = [1, 1]} : vector<9x256xf32> to vector<1x256xf32>
    %95 = vector.broadcast %94 : vector<1x256xf32> to vector<8x256xf32>
    %96 = arith.mulf %93, %95 : vector<8x256xf32>
    %c56 = arith.constant 56 : index
    %c0_54 = arith.constant 0 : index
    %97 = vector.load %arg16[%c56, %c0_54] : memref<72x256xf32, #tpu.memory_space<vmem>>, vector<8x256xf32>
    tpu.vector_store %arg16[%c56, %c0_54], %96 {strides = array<i32>} : memref<72x256xf32, #tpu.memory_space<vmem>>, vector<8x256xf32>,
    %c239_i32_55 = arith.constant 239 : i32
    %98 = tpu.dynamic_rotate %58 by %c239_i32_55 dim 1 : vector<8x256xf32>, i32 -> vector<8x256xf32>
    %99 = vector.extract_strided_slice %0 {offsets = [8, 0], sizes = [1, 256], strides = [1, 1]} : vector<9x256xf32> to vector<1x256xf32>
    %100 = vector.broadcast %99 : vector<1x256xf32> to vector<8x256xf32>
    %101 = arith.mulf %98, %100 : vector<8x256xf32>
    %c64 = arith.constant 64 : index
    %c0_56 = arith.constant 0 : index
    %102 = vector.load %arg16[%c64, %c0_56] : memref<72x256xf32, #tpu.memory_space<vmem>>, vector<8x256xf32>
    tpu.vector_store %arg16[%c64, %c0_56], %101 {strides = array<i32>} : memref<72x256xf32, #tpu.memory_space<vmem>>, vector<8x256xf32>,
    %c0_57 = arith.constant 0 : index
    %c0_58 = arith.constant 0 : index
    %103 = vector.load %arg16[%c0_57, %c0_58] : memref<72x256xf32, #tpu.memory_space<vmem>>, vector<72x256xf32>
    %cst_59 = arith.constant dense<0.000000e+00> : vector<8x256xf32>
    %104 = tpu.matmul %3, %103, %cst_59 {dimension_numbers = #tpu.dot_dimension_numbers<[1], [0], [0], [1], [0, 0, 1, 1], [], []>} : vector<8x72xf32>, vector<72x256xf32>, vector<8x256xf32> -> vector<8x256xf32>
    %105 = vector.broadcast %4 : vector<8x1xf32> to vector<8x256xf32>
    %106 = arith.addf %104, %105 : vector<8x256xf32>
    %c0_60 = arith.constant 0 : index
    %c0_61 = arith.constant 0 : index
    %c0_62 = arith.constant 0 : index
    %107 = vector.load %arg11[%c0_60, %c0_61, %c0_62] : memref<1x8x256xf32, #tpu.memory_space<vmem>>, vector<1x8x256xf32>
    %108 = vector.shape_cast %107 : vector<1x8x256xf32> to vector<8x256xf32>
    %109 = vector.shape_cast %106 : vector<8x256xf32> to vector<1x8x256xf32>
    tpu.vector_store %arg11[%c0_60, %c0_61, %c0_62], %109 {strides = array<i32>} : memref<1x8x256xf32, #tpu.memory_space<vmem>>, vector<1x8x256xf32>,
    %110 = arith.addf %58, %106 : vector<8x256xf32>
    %c0_63 = arith.constant 0 : index
    %c0_64 = arith.constant 0 : index
    %c0_65 = arith.constant 0 : index
    %111 = vector.load %arg12[%c0_63, %c0_64, %c0_65] : memref<1x8x256xf32, #tpu.memory_space<vmem>>, vector<1x8x256xf32>
    %112 = vector.shape_cast %111 : vector<1x8x256xf32> to vector<8x256xf32>
    %113 = vector.shape_cast %110 : vector<8x256xf32> to vector<1x8x256xf32>
    tpu.vector_store %arg12[%c0_63, %c0_64, %c0_65], %113 {strides = array<i32>} : memref<1x8x256xf32, #tpu.memory_space<vmem>>, vector<1x8x256xf32>,
    %cst_66 = arith.constant 0.000000e+00 : f32
    %114 = vector.broadcast %cst_66 : f32 to vector<8x256xf32>
    %115 = arith.maximumf %110, %114 : vector<8x256xf32>
    %c0_67 = arith.constant 0 : index
    %c0_68 = arith.constant 0 : index
    %c0_69 = arith.constant 0 : index
    %116 = vector.load %arg13[%c0_67, %c0_68, %c0_69] : memref<1x8x256xf32, #tpu.memory_space<vmem>>, vector<1x8x256xf32>
    %117 = vector.shape_cast %116 : vector<1x8x256xf32> to vector<8x256xf32>
    %118 = vector.shape_cast %115 : vector<8x256xf32> to vector<1x8x256xf32>
    tpu.vector_store %arg13[%c0_67, %c0_68, %c0_69], %118 {strides = array<i32>} : memref<1x8x256xf32, #tpu.memory_space<vmem>>, vector<1x8x256xf32>,
    %119 = vector.extract_strided_slice %115 {offsets = [0, 0], sizes = [1, 256], strides = [1, 1]} : vector<8x256xf32> to vector<1x256xf32>
    %120 = vector.extract_strided_slice %115 {offsets = [1, 0], sizes = [1, 256], strides = [1, 1]} : vector<8x256xf32> to vector<1x256xf32>
    %121 = vector.extract_strided_slice %115 {offsets = [2, 0], sizes = [1, 256], strides = [1, 1]} : vector<8x256xf32> to vector<1x256xf32>
    %122 = vector.extract_strided_slice %115 {offsets = [3, 0], sizes = [1, 256], strides = [1, 1]} : vector<8x256xf32> to vector<1x256xf32>
    %123 = vector.extract_strided_slice %115 {offsets = [4, 0], sizes = [1, 256], strides = [1, 1]} : vector<8x256xf32> to vector<1x256xf32>
    %124 = vector.extract_strided_slice %115 {offsets = [5, 0], sizes = [1, 256], strides = [1, 1]} : vector<8x256xf32> to vector<1x256xf32>
    %125 = vector.extract_strided_slice %115 {offsets = [6, 0], sizes = [1, 256], strides = [1, 1]} : vector<8x256xf32> to vector<1x256xf32>
    %126 = vector.extract_strided_slice %115 {offsets = [7, 0], sizes = [1, 256], strides = [1, 1]} : vector<8x256xf32> to vector<1x256xf32>
    %127 = tpu.concatenate %119, %120, %121, %122, %123, %124, %125, %126 in 1 : vector<1x256xf32>, vector<1x256xf32>, vector<1x256xf32>, vector<1x256xf32>, vector<1x256xf32>, vector<1x256xf32>, vector<1x256xf32>, vector<1x256xf32> -> vector<1x2048xf32>
    %cst_70 = arith.constant dense<0.000000e+00> : vector<1x32xf32>
    %128 = tpu.matmul %127, %5, %cst_70 {dimension_numbers = #tpu.dot_dimension_numbers<[1], [0], [0], [1], [0, 0, 1, 1], [], []>} : vector<1x2048xf32>, vector<2048x32xf32>, vector<1x32xf32> -> vector<1x32xf32>
    %129 = arith.addf %128, %6 : vector<1x32xf32>
    %c0_71 = arith.constant 0 : index
    %c0_72 = arith.constant 0 : index
    %c0_73 = arith.constant 0 : index
    %130 = vector.load %arg14[%c0_71, %c0_72, %c0_73] : memref<1x1x32xf32, #tpu.memory_space<vmem>>, vector<1x1x32xf32>
    %131 = vector.shape_cast %130 : vector<1x1x32xf32> to vector<1x32xf32>
    %132 = vector.shape_cast %129 : vector<1x32xf32> to vector<1x1x32xf32>
    tpu.vector_store %arg14[%c0_71, %c0_72, %c0_73], %132 {strides = array<i32>} : memref<1x1x32xf32, #tpu.memory_space<vmem>>, vector<1x1x32xf32>,
    return
  }
  func.func @transform_0(%arg0: i32) -> (i32, i32, i32) {
    %c0_i32 = arith.constant 0 : i32
    %c0_i32_0 = arith.constant 0 : i32
    %c0_i32_1 = arith.constant 0 : i32
    return %arg0, %c0_i32, %c0_i32_0 : i32, i32, i32
  }
  func.func @transform_1(%arg0: i32) -> (i32, i32) {
    %c0_i32 = arith.constant 0 : i32
    %c0_i32_0 = arith.constant 0 : i32
    %c0_i32_1 = arith.constant 0 : i32
    return %c0_i32, %c0_i32_0 : i32, i32
  }
  func.func @transform_2(%arg0: i32) -> (i32, i32) {
    %c0_i32 = arith.constant 0 : i32
    %c0_i32_0 = arith.constant 0 : i32
    %c0_i32_1 = arith.constant 0 : i32
    return %c0_i32, %c0_i32_0 : i32, i32
  }
  func.func @transform_3(%arg0: i32) -> (i32, i32) {
    %c0_i32 = arith.constant 0 : i32
    %c0_i32_0 = arith.constant 0 : i32
    %c0_i32_1 = arith.constant 0 : i32
    return %c0_i32, %c0_i32_0 : i32, i32
  }
  func.func @transform_4(%arg0: i32) -> (i32, i32) {
    %c0_i32 = arith.constant 0 : i32
    %c0_i32_0 = arith.constant 0 : i32
    %c0_i32_1 = arith.constant 0 : i32
    return %c0_i32, %c0_i32_0 : i32, i32
  }
  func.func @transform_5(%arg0: i32) -> (i32, i32) {
    %c0_i32 = arith.constant 0 : i32
    %c0_i32_0 = arith.constant 0 : i32
    %c0_i32_1 = arith.constant 0 : i32
    return %c0_i32, %c0_i32_0 : i32, i32
  }
  func.func @transform_6(%arg0: i32) -> (i32, i32) {
    %c0_i32 = arith.constant 0 : i32
    %c0_i32_0 = arith.constant 0 : i32
    %c0_i32_1 = arith.constant 0 : i32
    return %c0_i32, %c0_i32_0 : i32, i32
  }
  func.func @transform_7(%arg0: i32) -> (i32, i32) {
    %c0_i32 = arith.constant 0 : i32
    %c0_i32_0 = arith.constant 0 : i32
    %c0_i32_1 = arith.constant 0 : i32
    return %c0_i32, %c0_i32_0 : i32, i32
  }
  func.func @transform_8(%arg0: i32) -> (i32, i32, i32) {
    %c0_i32 = arith.constant 0 : i32
    %c0_i32_0 = arith.constant 0 : i32
    %c0_i32_1 = arith.constant 0 : i32
    return %arg0, %c0_i32, %c0_i32_0 : i32, i32, i32
  }
  func.func @transform_9(%arg0: i32) -> (i32, i32, i32) {
    %c0_i32 = arith.constant 0 : i32
    %c0_i32_0 = arith.constant 0 : i32
    %c0_i32_1 = arith.constant 0 : i32
    return %arg0, %c0_i32, %c0_i32_0 : i32, i32, i32
  }
  func.func @transform_10(%arg0: i32) -> (i32, i32, i32) {
    %c0_i32 = arith.constant 0 : i32
    %c0_i32_0 = arith.constant 0 : i32
    %c0_i32_1 = arith.constant 0 : i32
    return %arg0, %c0_i32, %c0_i32_0 : i32, i32, i32
  }
  func.func @transform_11(%arg0: i32) -> (i32, i32, i32) {
    %c0_i32 = arith.constant 0 : i32
    %c0_i32_0 = arith.constant 0 : i32
    %c0_i32_1 = arith.constant 0 : i32
    return %arg0, %c0_i32, %c0_i32_0 : i32, i32, i32
  }
  func.func @transform_12(%arg0: i32) -> (i32, i32, i32) {
    %c0_i32 = arith.constant 0 : i32
    %c0_i32_0 = arith.constant 0 : i32
    %c0_i32_1 = arith.constant 0 : i32
    return %arg0, %c0_i32, %c0_i32_0 : i32, i32, i32
  }
  func.func @transform_13(%arg0: i32) -> (i32, i32, i32) {
    %c0_i32 = arith.constant 0 : i32
    %c0_i32_0 = arith.constant 0 : i32
    %c0_i32_1 = arith.constant 0 : i32
    return %arg0, %c0_i32, %c0_i32_0 : i32, i32, i32
  }
}

</mosaic_0001>

<llo_original>
// kernel: network_forward.1
$region0: #{network_forward.1}
  #allocation0 [shape = 'u32[]', space=smem, size = 0x4, offset = 0x4, fixed_abs, tag = 'smem constant byte address 0x4 - core index']
  #allocation1 [shape = 'u32[144,128]{1,0:T(1,128)}', space=vmem, size = 0x12000, scoped, tag = 'internal scratch']
  #allocation2 [shape = 'f32[36,256]{1,0:T(8,128)}', space=vmem, size = 0xa000, scoped, tag = 'scratch operand']
  #allocation3 [shape = 'f32[72,256]{1,0:T(8,128)}', space=vmem, size = 0x12000, scoped, tag = 'scratch operand']
  %s0 = inlined_call_operand.vmem [shape: f32[2,4,256], index: 0, kind: input, shape index: {}]
  %s1 = inlined_call_operand.vmem [shape: f32[9,256], index: 1, kind: input, shape index: {}]
  %s2 = inlined_call_operand.vmem [shape: f32[8,36], index: 2, kind: input, shape index: {}]
  %s3 = inlined_call_operand.vmem [shape: f32[8,1], index: 3, kind: input, shape index: {}]
  %s4 = inlined_call_operand.vmem [shape: f32[8,72], index: 4, kind: input, shape index: {}]
  %s5 = inlined_call_operand.vmem [shape: f32[8,1], index: 5, kind: input, shape index: {}]
  %s6 = inlined_call_operand.vmem [shape: f32[2048,32], index: 6, kind: input, shape index: {}]
  %s7 = inlined_call_operand.vmem [shape: f32[1,32], index: 7, kind: input, shape index: {}]
  %s8 = inlined_call_operand.vmem [shape: f32[2,8,256], index: 8, kind: output, shape index: {0}]
  %s9 = inlined_call_operand.vmem [shape: f32[2,8,256], index: 9, kind: output, shape index: {1}]
  %s10 = inlined_call_operand.vmem [shape: f32[2,8,256], index: 10, kind: output, shape index: {2}]
  %s11 = inlined_call_operand.vmem [shape: f32[2,8,256], index: 11, kind: output, shape index: {3}]
  %s12 = inlined_call_operand.vmem [shape: f32[2,8,256], index: 12, kind: output, shape index: {4}]
  %s13 = inlined_call_operand.hbm [shape: f32[2,1,32], index: 13, kind: output, shape index: {5}]
  %14 = xla_tuple %s8, %s9, %s10, %s11, %s12, %s13
  %s15 = sld [smem:[#allocation0]]
  $region105: #{network_forward.1} parent=0
    _
  %s17 = ssub.s32 1, %s15
  %s18 = scalar_select 0, %s17, %s15
  $region1: #{network_forward.1} parent=0
    #allocation4 [shape = 'u8[1024]{0}', space=vmem, size = 0x400, scoped, tag = 'output window, operand 5']
    #allocation5 [shape = 's32[2]{0}', space=sflag, size = 0x8, scoped, tag = 'scoped memory for network_forward.1']
    %19 = vsyncpa [#allocation5], 0
    %s20 = scalar_lea.sflag [#allocation5], 1
    %21 = vsyncpa %s20, 0
    loop: start=0, step=1, limit=4
    $region2: #{network_forward.1} parent=1 // loop_pre_header
      _
    $region3: #{network_forward.1} parent=1 // loop_header
      %s23 = sphi 0, %s27
      %p24 = scmp.ge.s32.totalorder %s23, 4
      %s33 = sphi 0, %s35
      %s36 = sphi 0, %s33
      %s37 = sphi 0, %s36
      %s53 = sphi 0, %s37
      %s57 = sphi 0, %s57
      %s59 = sphi 0, %s57
      %s60 = sphi 0, %s59
      %s74 = sphi 0, %s60
      %s78 = sphi 0, %s78
      %s80 = sphi 0, %s78
      %s81 = sphi 0, %s80
      %s95 = sphi 0, %s81
      %s99 = sphi 0, %s99
      %s101 = sphi 0, %s99
      %s102 = sphi 0, %s101
      %s116 = sphi 0, %s102
      %s120 = sphi 0, %s120
      %s122 = sphi 0, %s120
      %s123 = sphi 0, %s122
      %s137 = sphi 0, %s123
      %s141 = sphi 0, %s141
      %s143 = sphi 0, %s141
      %s144 = sphi 0, %s143
      %s158 = sphi 0, %s144
      %s162 = sphi 0, %s162
      %s164 = sphi 0, %s162
      %s165 = sphi 0, %s164
      %s179 = sphi 0, %s165
      %s183 = sphi 0, %s183
      %s185 = sphi 0, %s183
      %s186 = sphi 0, %s185
      %s200 = sphi 0, %s186
      %s206 = sphi 0, %s208
      %s209 = sphi 0, %s206
      %s210 = sphi 0, %s209
      %s226 = sphi 0, %s210
      %s232 = sphi 0, %s234
      %s235 = sphi 0, %s232
      %s236 = sphi 0, %s235
      %s252 = sphi 0, %s236
      %s258 = sphi 0, %s260
      %s261 = sphi 0, %s258
      %s262 = sphi 0, %s261
      %s278 = sphi 0, %s262
      %s284 = sphi 0, %s286
      %s287 = sphi 0, %s284
      %s288 = sphi 0, %s287
      %s304 = sphi 0, %s288
      %s310 = sphi 0, %s312
      %s313 = sphi 0, %s310
      %s314 = sphi 0, %s313
      %s330 = sphi 0, %s314
      %s336 = sphi 0, %s338
      %s339 = sphi 0, %s336
      %s340 = sphi 0, %s339
      %s356 = sphi 0, %s340
    $region4: #{network_forward.1} parent=1 // loop_header_branch
      %26 = sbr.rel (%p24) target = $region8
    $region5: #{network_forward.1} parent=1 // loop_body
      %s28 = ssub.s32 %s23, 1
      %s29 = ssub.s32 %s23, 2
      %s30 = sadd.s32 %s23, 1
      %s31 = ssub.s32 %s23, %s30
      %p32 = scmp.eq.s32.totalorder %s31, 0
      %s34 = sadd.s32 %s33, 1
      %s35 = scalar_select %p32, %s33, %s34
      %p38 = pneg %p32
      %p39 = scmp.eq.s32.totalorder %s23, 1
      %p40 = por %p38, %p39
      %p41 = scmp.ne.s32.totalorder %s33, %s36
      %p42 = scmp.eq.s32.totalorder %s23, 0
      %p43 = por %p41, %p42
      %p44 = scmp.ne.s32.totalorder %s33, %s36
      %p45 = scmp.eq.s32.totalorder %s28, 1
      %p46 = por %p44, %p45
      %p47 = scmp.ne.s32.totalorder %s36, %s37
      %p48 = scmp.eq.s32.totalorder %s28, 0
      %p49 = por %p47, %p48
      %p50 = scmp.ne.s32.totalorder %s36, %s37
      %p51 = scmp.eq.s32.totalorder %s29, 1
      %p52 = por %p50, %p51
      %p54 = scmp.ne.s32.totalorder %s37, %s53
      %p55 = scmp.eq.s32.totalorder %s29, 0
      %p56 = por %p54, %p55
      %s58 = sadd.s32 %s57, 1
      %p61 = scmp.eq.s32.totalorder %s23, 1
      %p62 = scmp.ne.s32.totalorder %s57, %s59
      %p63 = scmp.eq.s32.totalorder %s23, 0
      %p64 = por %p62, %p63
      %p65 = scmp.ne.s32.totalorder %s57, %s59
      %p66 = scmp.eq.s32.totalorder %s28, 1
      %p67 = por %p65, %p66
      %p68 = scmp.ne.s32.totalorder %s59, %s60
      %p69 = scmp.eq.s32.totalorder %s28, 0
      %p70 = por %p68, %p69
      %p71 = scmp.ne.s32.totalorder %s59, %s60
      %p72 = scmp.eq.s32.totalorder %s29, 1
      %p73 = por %p71, %p72
      %p75 = scmp.ne.s32.totalorder %s60, %s74
      %p76 = scmp.eq.s32.totalorder %s29, 0
      %p77 = por %p75, %p76
      %s79 = sadd.s32 %s78, 1
      %p82 = scmp.eq.s32.totalorder %s23, 1
      %p83 = scmp.ne.s32.totalorder %s78, %s80
      %p84 = scmp.eq.s32.totalorder %s23, 0
      %p85 = por %p83, %p84
      %p86 = scmp.ne.s32.totalorder %s78, %s80
      %p87 = scmp.eq.s32.totalorder %s28, 1
      %p88 = por %p86, %p87
      %p89 = scmp.ne.s32.totalorder %s80, %s81
      %p90 = scmp.eq.s32.totalorder %s28, 0
      %p91 = por %p89, %p90
      %p92 = scmp.ne.s32.totalorder %s80, %s81
      %p93 = scmp.eq.s32.totalorder %s29, 1
      %p94 = por %p92, %p93
      %p96 = scmp.ne.s32.totalorder %s81, %s95
      %p97 = scmp.eq.s32.totalorder %s29, 0
      %p98 = por %p96, %p97
      %s100 = sadd.s32 %s99, 1
      %p103 = scmp.eq.s32.totalorder %s23, 1
      %p104 = scmp.ne.s32.totalorder %s99, %s101
      %p105 = scmp.eq.s32.totalorder %s23, 0
      %p106 = por %p104, %p105
      %p107 = scmp.ne.s32.totalorder %s99, %s101
      %p108 = scmp.eq.s32.totalorder %s28, 1
      %p109 = por %p107, %p108
      %p110 = scmp.ne.s32.totalorder %s101, %s102
      %p111 = scmp.eq.s32.totalorder %s28, 0
      %p112 = por %p110, %p111
      %p113 = scmp.ne.s32.totalorder %s101, %s102
      %p114 = scmp.eq.s32.totalorder %s29, 1
      %p115 = por %p113, %p114
      %p117 = scmp.ne.s32.totalorder %s102, %s116
      %p118 = scmp.eq.s32.totalorder %s29, 0
      %p119 = por %p117, %p118
      %s121 = sadd.s32 %s120, 1
      %p124 = scmp.eq.s32.totalorder %s23, 1
      %p125 = scmp.ne.s32.totalorder %s120, %s122
      %p126 = scmp.eq.s32.totalorder %s23, 0
      %p127 = por %p125, %p126
      %p128 = scmp.ne.s32.totalorder %s120, %s122
      %p129 = scmp.eq.s32.totalorder %s28, 1
      %p130 = por %p128, %p129
      %p131 = scmp.ne.s32.totalorder %s122, %s123
      %p132 = scmp.eq.s32.totalorder %s28, 0
      %p133 = por %p131, %p132
      %p134 = scmp.ne.s32.totalorder %s122, %s123
      %p135 = scmp.eq.s32.totalorder %s29, 1
      %p136 = por %p134, %p135
      %p138 = scmp.ne.s32.totalorder %s123, %s137
      %p139 = scmp.eq.s32.totalorder %s29, 0
      %p140 = por %p138, %p139
      %s142 = sadd.s32 %s141, 1
      %p145 = scmp.eq.s32.totalorder %s23, 1
      %p146 = scmp.ne.s32.totalorder %s141, %s143
      %p147 = scmp.eq.s32.totalorder %s23, 0
      %p148 = por %p146, %p147
      %p149 = scmp.ne.s32.totalorder %s141, %s143
      %p150 = scmp.eq.s32.totalorder %s28, 1
      %p151 = por %p149, %p150
      %p152 = scmp.ne.s32.totalorder %s143, %s144
      %p153 = scmp.eq.s32.totalorder %s28, 0
      %p154 = por %p152, %p153
      %p155 = scmp.ne.s32.totalorder %s143, %s144
      %p156 = scmp.eq.s32.totalorder %s29, 1
      %p157 = por %p155, %p156
      %p159 = scmp.ne.s32.totalorder %s144, %s158
      %p160 = scmp.eq.s32.totalorder %s29, 0
      %p161 = por %p159, %p160
      %s163 = sadd.s32 %s162, 1
      %p166 = scmp.eq.s32.totalorder %s23, 1
      %p167 = scmp.ne.s32.totalorder %s162, %s164
      %p168 = scmp.eq.s32.totalorder %s23, 0
      %p169 = por %p167, %p168
      %p170 = scmp.ne.s32.totalorder %s162, %s164
      %p171 = scmp.eq.s32.totalorder %s28, 1
      %p172 = por %p170, %p171
      %p173 = scmp.ne.s32.totalorder %s164, %s165
      %p174 = scmp.eq.s32.totalorder %s28, 0
      %p175 = por %p173, %p174
      %p176 = scmp.ne.s32.totalorder %s164, %s165
      %p177 = scmp.eq.s32.totalorder %s29, 1
      %p178 = por %p176, %p177
      %p180 = scmp.ne.s32.totalorder %s165, %s179
      %p181 = scmp.eq.s32.totalorder %s29, 0
      %p182 = por %p180, %p181
      %s184 = sadd.s32 %s183, 1
      %p187 = scmp.eq.s32.totalorder %s23, 1
      %p188 = scmp.ne.s32.totalorder %s183, %s185
      %p189 = scmp.eq.s32.totalorder %s23, 0
      %p190 = por %p188, %p189
      %p191 = scmp.ne.s32.totalorder %s183, %s185
      %p192 = scmp.eq.s32.totalorder %s28, 1
      %p193 = por %p191, %p192
      %p194 = scmp.ne.s32.totalorder %s185, %s186
      %p195 = scmp.eq.s32.totalorder %s28, 0
      %p196 = por %p194, %p195
      %p197 = scmp.ne.s32.totalorder %s185, %s186
      %p198 = scmp.eq.s32.totalorder %s29, 1
      %p199 = por %p197, %p198
      %p201 = scmp.ne.s32.totalorder %s186, %s200
      %p202 = scmp.eq.s32.totalorder %s29, 0
      %p203 = por %p201, %p202
      %s204 = ssub.s32 %s23, %s30
      %p205 = scmp.eq.s32.totalorder %s204, 0
      %s207 = sadd.s32 %s206, 1
      %s208 = scalar_select %p205, %s206, %s207
      %p211 = pneg %p205
      %p212 = scmp.eq.s32.totalorder %s23, 1
      %p213 = por %p211, %p212
      %p214 = scmp.ne.s32.totalorder %s206, %s209
      %p215 = scmp.eq.s32.totalorder %s23, 0
      %p216 = por %p214, %p215
      %p217 = scmp.ne.s32.totalorder %s206, %s209
      %p218 = scmp.eq.s32.totalorder %s28, 1
      %p219 = por %p217, %p218
      %p220 = scmp.ne.s32.totalorder %s209, %s210
      %p221 = scmp.eq.s32.totalorder %s28, 0
      %p222 = por %p220, %p221
      %p223 = scmp.ne.s32.totalorder %s209, %s210
      %p224 = scmp.eq.s32.totalorder %s29, 1
      %p225 = por %p223, %p224
      %p227 = scmp.ne.s32.totalorder %s210, %s226
      %p228 = scmp.eq.s32.totalorder %s29, 0
      %p229 = por %p227, %p228
      %s230 = ssub.s32 %s23, %s30
      %p231 = scmp.eq.s32.totalorder %s230, 0
      %s233 = sadd.s32 %s232, 1
      %s234 = scalar_select %p231, %s232, %s233
      %p237 = pneg %p231
      %p238 = scmp.eq.s32.totalorder %s23, 1
      %p239 = por %p237, %p238
      %p240 = scmp.ne.s32.totalorder %s232, %s235
      %p241 = scmp.eq.s32.totalorder %s23, 0
      %p242 = por %p240, %p241
      %p243 = scmp.ne.s32.totalorder %s232, %s235
      %p244 = scmp.eq.s32.totalorder %s28, 1
      %p245 = por %p243, %p244
      %p246 = scmp.ne.s32.totalorder %s235, %s236
      %p247 = scmp.eq.s32.totalorder %s28, 0
      %p248 = por %p246, %p247
      %p249 = scmp.ne.s32.totalorder %s235, %s236
      %p250 = scmp.eq.s32.totalorder %s29, 1
      %p251 = por %p249, %p250
      %p253 = scmp.ne.s32.totalorder %s236, %s252
      %p254 = scmp.eq.s32.totalorder %s29, 0
      %p255 = por %p253, %p254
      %s256 = ssub.s32 %s23, %s30
      %p257 = scmp.eq.s32.totalorder %s256, 0
      %s259 = sadd.s32 %s258, 1
      %s260 = scalar_select %p257, %s258, %s259
      %p263 = pneg %p257
      %p264 = scmp.eq.s32.totalorder %s23, 1
      %p265 = por %p263, %p264
      %p266 = scmp.ne.s32.totalorder %s258, %s261
      %p267 = scmp.eq.s32.totalorder %s23, 0
      %p268 = por %p266, %p267
      %p269 = scmp.ne.s32.totalorder %s258, %s261
      %p270 = scmp.eq.s32.totalorder %s28, 1
      %p271 = por %p269, %p270
      %p272 = scmp.ne.s32.totalorder %s261, %s262
      %p273 = scmp.eq.s32.totalorder %s28, 0
      %p274 = por %p272, %p273
      %p275 = scmp.ne.s32.totalorder %s261, %s262
      %p276 = scmp.eq.s32.totalorder %s29, 1
      %p277 = por %p275, %p276
      %p279 = scmp.ne.s32.totalorder %s262, %s278
      %p280 = scmp.eq.s32.totalorder %s29, 0
      %p281 = por %p279, %p280
      %s282 = ssub.s32 %s23, %s30
      %p283 = scmp.eq.s32.totalorder %s282, 0
      %s285 = sadd.s32 %s284, 1
      %s286 = scalar_select %p283, %s284, %s285
      %p289 = pneg %p283
      %p290 = scmp.eq.s32.totalorder %s23, 1
      %p291 = por %p289, %p290
      %p292 = scmp.ne.s32.totalorder %s284, %s287
      %p293 = scmp.eq.s32.totalorder %s23, 0
      %p294 = por %p292, %p293
      %p295 = scmp.ne.s32.totalorder %s284, %s287
      %p296 = scmp.eq.s32.totalorder %s28, 1
      %p297 = por %p295, %p296
      %p298 = scmp.ne.s32.totalorder %s287, %s288
      %p299 = scmp.eq.s32.totalorder %s28, 0
      %p300 = por %p298, %p299
      %p301 = scmp.ne.s32.totalorder %s287, %s288
      %p302 = scmp.eq.s32.totalorder %s29, 1
      %p303 = por %p301, %p302
      %p305 = scmp.ne.s32.totalorder %s288, %s304
      %p306 = scmp.eq.s32.totalorder %s29, 0
      %p307 = por %p305, %p306
      %s308 = ssub.s32 %s23, %s30
      %p309 = scmp.eq.s32.totalorder %s308, 0
      %s311 = sadd.s32 %s310, 1
      %s312 = scalar_select %p309, %s310, %s311
      %p315 = pneg %p309
      %p316 = scmp.eq.s32.totalorder %s23, 1
      %p317 = por %p315, %p316
      %p318 = scmp.ne.s32.totalorder %s310, %s313
      %p319 = scmp.eq.s32.totalorder %s23, 0
      %p320 = por %p318, %p319
      %p321 = scmp.ne.s32.totalorder %s310, %s313
      %p322 = scmp.eq.s32.totalorder %s28, 1
      %p323 = por %p321, %p322
      %p324 = scmp.ne.s32.totalorder %s313, %s314
      %p325 = scmp.eq.s32.totalorder %s28, 0
      %p326 = por %p324, %p325
      %p327 = scmp.ne.s32.totalorder %s313, %s314
      %p328 = scmp.eq.s32.totalorder %s29, 1
      %p329 = por %p327, %p328
      %p331 = scmp.ne.s32.totalorder %s314, %s330
      %p332 = scmp.eq.s32.totalorder %s29, 0
      %p333 = por %p331, %p332
      %s334 = ssub.s32 %s23, %s30
      %p335 = scmp.eq.s32.totalorder %s334, 0
      %s337 = sadd.s32 %s336, 1
      %s338 = scalar_select %p335, %s336, %s337
      %p341 = pneg %p335
      %p342 = scmp.eq.s32.totalorder %s23, 1
      %p343 = por %p341, %p342
      %p344 = scmp.ne.s32.totalorder %s336, %s339
      %p345 = scmp.eq.s32.totalorder %s23, 0
      %p346 = por %p344, %p345
      %p347 = scmp.ne.s32.totalorder %s336, %s339
      %p348 = scmp.eq.s32.totalorder %s28, 1
      %p349 = por %p347, %p348
      %p350 = scmp.ne.s32.totalorder %s339, %s340
      %p351 = scmp.eq.s32.totalorder %s28, 0
      %p352 = por %p350, %p351
      %p353 = scmp.ne.s32.totalorder %s339, %s340
      %p354 = scmp.eq.s32.totalorder %s29, 1
      %p355 = por %p353, %p354
      %p357 = scmp.ne.s32.totalorder %s340, %s356
      %p358 = scmp.eq.s32.totalorder %s29, 0
      %p359 = por %p357, %p358
      %p360 = scmp.le.s32.totalorder 1, %s23
      %p361 = scmp.lt.s32.totalorder %s23, 3
      %p362 = pnand %p360, %p361
      %p363 = pneg %p362
      // Predicated region
      $region9: #{network_forward.1} parent=5 // pred_check
        _
      $region10: #{network_forward.1} parent=5 // pred_check_branch
        %365 = sbr.rel (%p362) target = $region12
      $region11: #{network_forward.1} parent=5 // pred_region
        %s366 = ssub.s32 %s23, 1
        // Predicated region
        $region13: #{network_forward.1} parent=11 // pred_check
          %p367 = pneg %p70
        $region14: #{network_forward.1} parent=11 // pred_check_branch
          %369 = sbr.rel (%p367) target = $region16
        $region15: #{network_forward.1} parent=11 // pred_region
          _
        $region16: #{network_forward.1} parent=11 // pred_fallthru
          _
        // Predicated region
        $region17: #{network_forward.1} parent=11 // pred_check
          %p370 = pneg %p91
        $region18: #{network_forward.1} parent=11 // pred_check_branch
          %372 = sbr.rel (%p370) target = $region20
        $region19: #{network_forward.1} parent=11 // pred_region
          _
        $region20: #{network_forward.1} parent=11 // pred_fallthru
          _
        // Predicated region
        $region21: #{network_forward.1} parent=11 // pred_check
          %p373 = pneg %p112
        $region22: #{network_forward.1} parent=11 // pred_check_branch
          %375 = sbr.rel (%p373) target = $region24
        $region23: #{network_forward.1} parent=11 // pred_region
          _
        $region24: #{network_forward.1} parent=11 // pred_fallthru
          _
        // Predicated region
        $region25: #{network_forward.1} parent=11 // pred_check
          %p376 = pneg %p133
        $region26: #{network_forward.1} parent=11 // pred_check_branch
          %378 = sbr.rel (%p376) target = $region28
        $region27: #{network_forward.1} parent=11 // pred_region
          _
        $region28: #{network_forward.1} parent=11 // pred_fallthru
          _
        // Predicated region
        $region29: #{network_forward.1} parent=11 // pred_check
          %p379 = pneg %p154
        $region30: #{network_forward.1} parent=11 // pred_check_branch
          %381 = sbr.rel (%p379) target = $region32
        $region31: #{network_forward.1} parent=11 // pred_region
          _
        $region32: #{network_forward.1} parent=11 // pred_fallthru
          _
        // Predicated region
        $region33: #{network_forward.1} parent=11 // pred_check
          %p382 = pneg %p175
        $region34: #{network_forward.1} parent=11 // pred_check_branch
          %384 = sbr.rel (%p382) target = $region36
        $region35: #{network_forward.1} parent=11 // pred_region
          _
        $region36: #{network_forward.1} parent=11 // pred_fallthru
          _
        // Predicated region
        $region37: #{network_forward.1} parent=11 // pred_check
          %p385 = pneg %p196
        $region38: #{network_forward.1} parent=11 // pred_check_branch
          %387 = sbr.rel (%p385) target = $region40
        $region39: #{network_forward.1} parent=11 // pred_region
          _
        $region40: #{network_forward.1} parent=11 // pred_fallthru
          _
      $region12: #{network_forward.1} parent=5 // pred_fallthru
        _
      %p388 = scmp.lt.s32.totalorder %s23, 2
      // Predicated region
      $region41: #{network_forward.1} parent=5 // pred_check
        %p389 = pneg %p388
      $region42: #{network_forward.1} parent=5 // pred_check_branch
        %391 = sbr.rel (%p389) target = $region44
      $region43: #{network_forward.1} parent=5 // pred_region
        // Predicated region
        $region45: #{network_forward.1} parent=43 // pred_check
          %p392 = pneg %p43
        $region46: #{network_forward.1} parent=43 // pred_check_branch
          %394 = sbr.rel (%p392) target = $region48
        $region47: #{network_forward.1} parent=43 // pred_region
          %p395 = scmp.lt.s32.totalorder %s23, 1
          %s396 = scalar_select %p395, %s23, 1
          %s397 = smul.addr %s396, 2
          %s398 = smul.addr %s397, 4
          %s399 = scalar_lea.vmem %s0, %s398
        $region48: #{network_forward.1} parent=43 // pred_fallthru
          _
      $region44: #{network_forward.1} parent=5 // pred_fallthru
        _
      %p400 = scmp.le.s32.totalorder 1, %s23
      %p401 = scmp.lt.s32.totalorder %s23, 3
      %p402 = pnand %p400, %p401
      %p403 = pneg %p402
      // Predicated region
      $region49: #{network_forward.1} parent=5 // pred_check
        _
      $region50: #{network_forward.1} parent=5 // pred_check_branch
        %405 = sbr.rel (%p402) target = $region52
      $region51: #{network_forward.1} parent=5 // pred_region
        %s406 = ssub.s32 %s23, 1
        %p407 = scmp.lt.s32.totalorder %s28, 1
        %s408 = scalar_select %p407, %s28, 1
        %s409 = smul.addr %s408, 2
        %s410 = smul.addr %s409, 4
        %s411 = scalar_lea.vmem %s0, %s410
        %p412 = pneg %p49
        %p413 = pneg %p46
        %p414 = pneg %p70
        %p415 = pneg %p67
        %p416 = pneg %p91
        %p417 = pneg %p88
        %p418 = pneg %p112
        %p419 = pneg %p109
        %p420 = pneg %p133
        %p421 = pneg %p130
        %p422 = pneg %p154
        %p423 = pneg %p151
        %p424 = pneg %p175
        %p425 = pneg %p172
        %p426 = pneg %p196
        %p427 = pneg %p193
        %p428 = pneg %p222
        %p429 = pneg %p219
        %p430 = scmp.lt.s32.totalorder %s28, 1
        %s431 = scalar_select %p430, %s28, 1
        %s432 = smul.addr %s431, 2
        %s433 = smul.addr %s432, 8
        %s434 = scalar_lea.vmem %s8, %s433
        %p435 = pneg %p248
        %p436 = pneg %p245
        %p437 = scmp.lt.s32.totalorder %s28, 1
        %s438 = scalar_select %p437, %s28, 1
        %s439 = smul.addr %s438, 2
        %s440 = smul.addr %s439, 8
        %s441 = scalar_lea.vmem %s9, %s440
        %p442 = pneg %p274
        %p443 = pneg %p271
        %p444 = scmp.lt.s32.totalorder %s28, 1
        %s445 = scalar_select %p444, %s28, 1
        %s446 = smul.addr %s445, 2
        %s447 = smul.addr %s446, 8
        %s448 = scalar_lea.vmem %s10, %s447
        %p449 = pneg %p300
        %p450 = pneg %p297
        %p451 = scmp.lt.s32.totalorder %s28, 1
        %s452 = scalar_select %p451, %s28, 1
        %s453 = smul.addr %s452, 2
        %s454 = smul.addr %s453, 8
        %s455 = scalar_lea.vmem %s11, %s454
        %p456 = pneg %p326
        %p457 = pneg %p323
        %p458 = scmp.lt.s32.totalorder %s28, 1
        %s459 = scalar_select %p458, %s28, 1
        %s460 = smul.addr %s459, 2
        %s461 = smul.addr %s460, 8
        %s462 = scalar_lea.vmem %s12, %s461
        %p463 = pneg %p352
        %p464 = pneg %p349
        %s465 = sand.u32 %s339, 1
        %s466 = scalar_lea.sflag [#allocation5], %s465
        %s467 = sand.u32 %s339, 1
        %s468 = scalar_lea.vmem [#allocation4], %s467
        %p469 = scmp.lt.s32.totalorder %s28, 1
        %s470 = scalar_select %p469, %s28, 1
        %s471 = smul.addr %s470, 2
        %s472 = smul.addr %s471, 4
        %s473 = scalar_lea.vmem %s0, %s472
        %p474 = scmp.lt.s32.totalorder %s28, 1
        %s475 = scalar_select %p474, %s28, 1
        %s476 = smul.addr %s475, 2
        %s477 = smul.addr %s476, 8
        %s478 = scalar_lea.vmem %s8, %s477
        %p479 = scmp.lt.s32.totalorder %s28, 1
        %s480 = scalar_select %p479, %s28, 1
        %s481 = smul.addr %s480, 2
        %s482 = smul.addr %s481, 8
        %s483 = scalar_lea.vmem %s9, %s482
        %p484 = scmp.lt.s32.totalorder %s28, 1
        %s485 = scalar_select %p484, %s28, 1
        %s486 = smul.addr %s485, 2
        %s487 = smul.addr %s486, 8
        %s488 = scalar_lea.vmem %s10, %s487
        %p489 = scmp.lt.s32.totalorder %s28, 1
        %s490 = scalar_select %p489, %s28, 1
        %s491 = smul.addr %s490, 2
        %s492 = smul.addr %s491, 8
        %s493 = scalar_lea.vmem %s11, %s492
        %p494 = scmp.lt.s32.totalorder %s28, 1
        %s495 = scalar_select %p494, %s28, 1
        %s496 = smul.addr %s495, 2
        %s497 = smul.addr %s496, 8
        %s498 = scalar_lea.vmem %s12, %s497
        %v499 = vld [vmem:[%s1] sm:$0xff]
        %v500 = vld [vmem:[%s1 + $0x8] sm:$0xff]
        %v501 = vld [vmem:[%s1 + $0x10] sm:$0x1]
        %v502 = vld [vmem:[%s1 + $0x18] sm:$0x1]
        %v503 = vld [vmem:[%s2] sm:$0xff]
        %v504 = vld [vmem:[%s3] sm:$0xff]
        %v505 = vld [vmem:[%s4] sm:$0xff]
        %v506 = vld [vmem:[%s5] sm:$0xff]
        %v507 = vld [vmem:[%s6] sm:$0xff]
        %v508 = vld [vmem:[%s6 + $0x8] sm:$0xff]
        %v509 = vld [vmem:[%s6 + $0x10] sm:$0xff]
        %v510 = vld [vmem:[%s6 + $0x18] sm:$0xff]
        %v511 = vld [vmem:[%s6 + $0x20] sm:$0xff]
        %v512 = vld [vmem:[%s6 + $0x28] sm:$0xff]
        %v513 = vld [vmem:[%s6 + $0x30] sm:$0xff]
        %v514 = vld [vmem:[%s6 + $0x38] sm:$0xff]
        %v515 = vld [vmem:[%s6 + $0x40] sm:$0xff]
        %v516 = vld [vmem:[%s6 + $0x48] sm:$0xff]
        %v517 = vld [vmem:[%s6 + $0x50] sm:$0xff]
        %v518 = vld [vmem:[%s6 + $0x58] sm:$0xff]
        %v519 = vld [vmem:[%s6 + $0x60] sm:$0xff]
        %v520 = vld [vmem:[%s6 + $0x68] sm:$0xff]
        %v521 = vld [vmem:[%s6 + $0x70] sm:$0xff]
        %v522 = vld [vmem:[%s6 + $0x78] sm:$0xff]
        %v523 = vld [vmem:[%s6 + $0x80] sm:$0xff]
        %v524 = vld [vmem:[%s6 + $0x88] sm:$0xff]
        %v525 = vld [vmem:[%s6 + $0x90] sm:$0xff]
        %v526 = vld [vmem:[%s6 + $0x98] sm:$0xff]
        %v527 = vld [vmem:[%s6 + $0xa0] sm:$0xff]
        %v528 = vld [vmem:[%s6 + $0xa8] sm:$0xff]
        %v529 = vld [vmem:[%s6 + $0xb0] sm:$0xff]
        %v530 = vld [vmem:[%s6 + $0xb8] sm:$0xff]
        %v531 = vld [vmem:[%s6 + $0xc0] sm:$0xff]
        %v532 = vld [vmem:[%s6 + $0xc8] sm:$0xff]
        %v533 = vld [vmem:[%s6 + $0xd0] sm:$0xff]
        %v534 = vld [vmem:[%s6 + $0xd8] sm:$0xff]
        %v535 = vld [vmem:[%s6 + $0xe0] sm:$0xff]
        %v536 = vld [vmem:[%s6 + $0xe8] sm:$0xff]
        %v537 = vld [vmem:[%s6 + $0xf0] sm:$0xff]
        %v538 = vld [vmem:[%s6 + $0xf8] sm:$0xff]
        %v539 = vld [vmem:[%s6 + $0x100] sm:$0xff]
        %v540 = vld [vmem:[%s6 + $0x108] sm:$0xff]
        %v541 = vld [vmem:[%s6 + $0x110] sm:$0xff]
        %v542 = vld [vmem:[%s6 + $0x118] sm:$0xff]
        %v543 = vld [vmem:[%s6 + $0x120] sm:$0xff]
        %v544 = vld [vmem:[%s6 + $0x128] sm:$0xff]
        %v545 = vld [vmem:[%s6 + $0x130] sm:$0xff]
        %v546 = vld [vmem:[%s6 + $0x138] sm:$0xff]
        %v547 = vld [vmem:[%s6 + $0x140] sm:$0xff]
        %v548 = vld [vmem:[%s6 + $0x148] sm:$0xff]
        %v549 = vld [vmem:[%s6 + $0x150] sm:$0xff]
        %v550 = vld [vmem:[%s6 + $0x158] sm:$0xff]
        %v551 = vld [vmem:[%s6 + $0x160] sm:$0xff]
        %v552 = vld [vmem:[%s6 + $0x168] sm:$0xff]
        %v553 = vld [vmem:[%s6 + $0x170] sm:$0xff]
        %v554 = vld [vmem:[%s6 + $0x178] sm:$0xff]
        %v555 = vld [vmem:[%s6 + $0x180] sm:$0xff]
        %v556 = vld [vmem:[%s6 + $0x188] sm:$0xff]
        %v557 = vld [vmem:[%s6 + $0x190] sm:$0xff]
        %v558 = vld [vmem:[%s6 + $0x198] sm:$0xff]
        %v559 = vld [vmem:[%s6 + $0x1a0] sm:$0xff]
        %v560 = vld [vmem:[%s6 + $0x1a8] sm:$0xff]
        %v561 = vld [vmem:[%s6 + $0x1b0] sm:$0xff]
        %v562 = vld [vmem:[%s6 + $0x1b8] sm:$0xff]
        %v563 = vld [vmem:[%s6 + $0x1c0] sm:$0xff]
        %v564 = vld [vmem:[%s6 + $0x1c8] sm:$0xff]
        %v565 = vld [vmem:[%s6 + $0x1d0] sm:$0xff]
        %v566 = vld [vmem:[%s6 + $0x1d8] sm:$0xff]
        %v567 = vld [vmem:[%s6 + $0x1e0] sm:$0xff]
        %v568 = vld [vmem:[%s6 + $0x1e8] sm:$0xff]
        %v569 = vld [vmem:[%s6 + $0x1f0] sm:$0xff]
        %v570 = vld [vmem:[%s6 + $0x1f8] sm:$0xff]
        %v571 = vld [vmem:[%s6 + $0x200] sm:$0xff]
        %v572 = vld [vmem:[%s6 + $0x208] sm:$0xff]
        %v573 = vld [vmem:[%s6 + $0x210] sm:$0xff]
        %v574 = vld [vmem:[%s6 + $0x218] sm:$0xff]
        %v575 = vld [vmem:[%s6 + $0x220] sm:$0xff]
        %v576 = vld [vmem:[%s6 + $0x228] sm:$0xff]
        %v577 = vld [vmem:[%s6 + $0x230] sm:$0xff]
        %v578 = vld [vmem:[%s6 + $0x238] sm:$0xff]
        %v579 = vld [vmem:[%s6 + $0x240] sm:$0xff]
        %v580 = vld [vmem:[%s6 + $0x248] sm:$0xff]
        %v581 = vld [vmem:[%s6 + $0x250] sm:$0xff]
        %v582 = vld [vmem:[%s6 + $0x258] sm:$0xff]
        %v583 = vld [vmem:[%s6 + $0x260] sm:$0xff]
        %v584 = vld [vmem:[%s6 + $0x268] sm:$0xff]
        %v585 = vld [vmem:[%s6 + $0x270] sm:$0xff]
        %v586 = vld [vmem:[%s6 + $0x278] sm:$0xff]
        %v587 = vld [vmem:[%s6 + $0x280] sm:$0xff]
        %v588 = vld [vmem:[%s6 + $0x288] sm:$0xff]
        %v589 = vld [vmem:[%s6 + $0x290] sm:$0xff]
        %v590 = vld [vmem:[%s6 + $0x298] sm:$0xff]
        %v591 = vld [vmem:[%s6 + $0x2a0] sm:$0xff]
        %v592 = vld [vmem:[%s6 + $0x2a8] sm:$0xff]
        %v593 = vld [vmem:[%s6 + $0x2b0] sm:$0xff]
        %v594 = vld [vmem:[%s6 + $0x2b8] sm:$0xff]
        %v595 = vld [vmem:[%s6 + $0x2c0] sm:$0xff]
        %v596 = vld [vmem:[%s6 + $0x2c8] sm:$0xff]
        %v597 = vld [vmem:[%s6 + $0x2d0] sm:$0xff]
        %v598 = vld [vmem:[%s6 + $0x2d8] sm:$0xff]
        %v599 = vld [vmem:[%s6 + $0x2e0] sm:$0xff]
        %v600 = vld [vmem:[%s6 + $0x2e8] sm:$0xff]
        %v601 = vld [vmem:[%s6 + $0x2f0] sm:$0xff]
        %v602 = vld [vmem:[%s6 + $0x2f8] sm:$0xff]
        %v603 = vld [vmem:[%s6 + $0x300] sm:$0xff]
        %v604 = vld [vmem:[%s6 + $0x308] sm:$0xff]
        %v605 = vld [vmem:[%s6 + $0x310] sm:$0xff]
        %v606 = vld [vmem:[%s6 + $0x318] sm:$0xff]
        %v607 = vld [vmem:[%s6 + $0x320] sm:$0xff]
        %v608 = vld [vmem:[%s6 + $0x328] sm:$0xff]
        %v609 = vld [vmem:[%s6 + $0x330] sm:$0xff]
        %v610 = vld [vmem:[%s6 + $0x338] sm:$0xff]
        %v611 = vld [vmem:[%s6 + $0x340] sm:$0xff]
        %v612 = vld [vmem:[%s6 + $0x348] sm:$0xff]
        %v613 = vld [vmem:[%s6 + $0x350] sm:$0xff]
        %v614 = vld [vmem:[%s6 + $0x358] sm:$0xff]
        %v615 = vld [vmem:[%s6 + $0x360] sm:$0xff]
        %v616 = vld [vmem:[%s6 + $0x368] sm:$0xff]
        %v617 = vld [vmem:[%s6 + $0x370] sm:$0xff]
        %v618 = vld [vmem:[%s6 + $0x378] sm:$0xff]
        %v619 = vld [vmem:[%s6 + $0x380] sm:$0xff]
        %v620 = vld [vmem:[%s6 + $0x388] sm:$0xff]
        %v621 = vld [vmem:[%s6 + $0x390] sm:$0xff]
        %v622 = vld [vmem:[%s6 + $0x398] sm:$0xff]
        %v623 = vld [vmem:[%s6 + $0x3a0] sm:$0xff]
        %v624 = vld [vmem:[%s6 + $0x3a8] sm:$0xff]
        %v625 = vld [vmem:[%s6 + $0x3b0] sm:$0xff]
        %v626 = vld [vmem:[%s6 + $0x3b8] sm:$0xff]
        %v627 = vld [vmem:[%s6 + $0x3c0] sm:$0xff]
        %v628 = vld [vmem:[%s6 + $0x3c8] sm:$0xff]
        %v629 = vld [vmem:[%s6 + $0x3d0] sm:$0xff]
        %v630 = vld [vmem:[%s6 + $0x3d8] sm:$0xff]
        %v631 = vld [vmem:[%s6 + $0x3e0] sm:$0xff]
        %v632 = vld [vmem:[%s6 + $0x3e8] sm:$0xff]
        %v633 = vld [vmem:[%s6 + $0x3f0] sm:$0xff]
        %v634 = vld [vmem:[%s6 + $0x3f8] sm:$0xff]
        %v635 = vld [vmem:[%s6 + $0x400] sm:$0xff]
        %v636 = vld [vmem:[%s6 + $0x408] sm:$0xff]
        %v637 = vld [vmem:[%s6 + $0x410] sm:$0xff]
        %v638 = vld [vmem:[%s6 + $0x418] sm:$0xff]
        %v639 = vld [vmem:[%s6 + $0x420] sm:$0xff]
        %v640 = vld [vmem:[%s6 + $0x428] sm:$0xff]
        %v641 = vld [vmem:[%s6 + $0x430] sm:$0xff]
        %v642 = vld [vmem:[%s6 + $0x438] sm:$0xff]
        %v643 = vld [vmem:[%s6 + $0x440] sm:$0xff]
        %v644 = vld [vmem:[%s6 + $0x448] sm:$0xff]
        %v645 = vld [vmem:[%s6 + $0x450] sm:$0xff]
        %v646 = vld [vmem:[%s6 + $0x458] sm:$0xff]
        %v647 = vld [vmem:[%s6 + $0x460] sm:$0xff]
        %v648 = vld [vmem:[%s6 + $0x468] sm:$0xff]
        %v649 = vld [vmem:[%s6 + $0x470] sm:$0xff]
        %v650 = vld [vmem:[%s6 + $0x478] sm:$0xff]
        %v651 = vld [vmem:[%s6 + $0x480] sm:$0xff]
        %v652 = vld [vmem:[%s6 + $0x488] sm:$0xff]
        %v653 = vld [vmem:[%s6 + $0x490] sm:$0xff]
        %v654 = vld [vmem:[%s6 + $0x498] sm:$0xff]
        %v655 = vld [vmem:[%s6 + $0x4a0] sm:$0xff]
        %v656 = vld [vmem:[%s6 + $0x4a8] sm:$0xff]
        %v657 = vld [vmem:[%s6 + $0x4b0] sm:$0xff]
        %v658 = vld [vmem:[%s6 + $0x4b8] sm:$0xff]
        %v659 = vld [vmem:[%s6 + $0x4c0] sm:$0xff]
        %v660 = vld [vmem:[%s6 + $0x4c8] sm:$0xff]
        %v661 = vld [vmem:[%s6 + $0x4d0] sm:$0xff]
        %v662 = vld [vmem:[%s6 + $0x4d8] sm:$0xff]
        %v663 = vld [vmem:[%s6 + $0x4e0] sm:$0xff]
        %v664 = vld [vmem:[%s6 + $0x4e8] sm:$0xff]
        %v665 = vld [vmem:[%s6 + $0x4f0] sm:$0xff]
        %v666 = vld [vmem:[%s6 + $0x4f8] sm:$0xff]
        %v667 = vld [vmem:[%s6 + $0x500] sm:$0xff]
        %v668 = vld [vmem:[%s6 + $0x508] sm:$0xff]
        %v669 = vld [vmem:[%s6 + $0x510] sm:$0xff]
        %v670 = vld [vmem:[%s6 + $0x518] sm:$0xff]
        %v671 = vld [vmem:[%s6 + $0x520] sm:$0xff]
        %v672 = vld [vmem:[%s6 + $0x528] sm:$0xff]
        %v673 = vld [vmem:[%s6 + $0x530] sm:$0xff]
        %v674 = vld [vmem:[%s6 + $0x538] sm:$0xff]
        %v675 = vld [vmem:[%s6 + $0x540] sm:$0xff]
        %v676 = vld [vmem:[%s6 + $0x548] sm:$0xff]
        %v677 = vld [vmem:[%s6 + $0x550] sm:$0xff]
        %v678 = vld [vmem:[%s6 + $0x558] sm:$0xff]
        %v679 = vld [vmem:[%s6 + $0x560] sm:$0xff]
        %v680 = vld [vmem:[%s6 + $0x568] sm:$0xff]
        %v681 = vld [vmem:[%s6 + $0x570] sm:$0xff]
        %v682 = vld [vmem:[%s6 + $0x578] sm:$0xff]
        %v683 = vld [vmem:[%s6 + $0x580] sm:$0xff]
        %v684 = vld [vmem:[%s6 + $0x588] sm:$0xff]
        %v685 = vld [vmem:[%s6 + $0x590] sm:$0xff]
        %v686 = vld [vmem:[%s6 + $0x598] sm:$0xff]
        %v687 = vld [vmem:[%s6 + $0x5a0] sm:$0xff]
        %v688 = vld [vmem:[%s6 + $0x5a8] sm:$0xff]
        %v689 = vld [vmem:[%s6 + $0x5b0] sm:$0xff]
        %v690 = vld [vmem:[%s6 + $0x5b8] sm:$0xff]
        %v691 = vld [vmem:[%s6 + $0x5c0] sm:$0xff]
        %v692 = vld [vmem:[%s6 + $0x5c8] sm:$0xff]
        %v693 = vld [vmem:[%s6 + $0x5d0] sm:$0xff]
        %v694 = vld [vmem:[%s6 + $0x5d8] sm:$0xff]
        %v695 = vld [vmem:[%s6 + $0x5e0] sm:$0xff]
        %v696 = vld [vmem:[%s6 + $0x5e8] sm:$0xff]
        %v697 = vld [vmem:[%s6 + $0x5f0] sm:$0xff]
        %v698 = vld [vmem:[%s6 + $0x5f8] sm:$0xff]
        %v699 = vld [vmem:[%s6 + $0x600] sm:$0xff]
        %v700 = vld [vmem:[%s6 + $0x608] sm:$0xff]
        %v701 = vld [vmem:[%s6 + $0x610] sm:$0xff]
        %v702 = vld [vmem:[%s6 + $0x618] sm:$0xff]
        %v703 = vld [vmem:[%s6 + $0x620] sm:$0xff]
        %v704 = vld [vmem:[%s6 + $0x628] sm:$0xff]
        %v705 = vld [vmem:[%s6 + $0x630] sm:$0xff]
        %v706 = vld [vmem:[%s6 + $0x638] sm:$0xff]
        %v707 = vld [vmem:[%s6 + $0x640] sm:$0xff]
        %v708 = vld [vmem:[%s6 + $0x648] sm:$0xff]
        %v709 = vld [vmem:[%s6 + $0x650] sm:$0xff]
        %v710 = vld [vmem:[%s6 + $0x658] sm:$0xff]
        %v711 = vld [vmem:[%s6 + $0x660] sm:$0xff]
        %v712 = vld [vmem:[%s6 + $0x668] sm:$0xff]
        %v713 = vld [vmem:[%s6 + $0x670] sm:$0xff]
        %v714 = vld [vmem:[%s6 + $0x678] sm:$0xff]
        %v715 = vld [vmem:[%s6 + $0x680] sm:$0xff]
        %v716 = vld [vmem:[%s6 + $0x688] sm:$0xff]
        %v717 = vld [vmem:[%s6 + $0x690] sm:$0xff]
        %v718 = vld [vmem:[%s6 + $0x698] sm:$0xff]
        %v719 = vld [vmem:[%s6 + $0x6a0] sm:$0xff]
        %v720 = vld [vmem:[%s6 + $0x6a8] sm:$0xff]
        %v721 = vld [vmem:[%s6 + $0x6b0] sm:$0xff]
        %v722 = vld [vmem:[%s6 + $0x6b8] sm:$0xff]
        %v723 = vld [vmem:[%s6 + $0x6c0] sm:$0xff]
        %v724 = vld [vmem:[%s6 + $0x6c8] sm:$0xff]
        %v725 = vld [vmem:[%s6 + $0x6d0] sm:$0xff]
        %v726 = vld [vmem:[%s6 + $0x6d8] sm:$0xff]
        %v727 = vld [vmem:[%s6 + $0x6e0] sm:$0xff]
        %v728 = vld [vmem:[%s6 + $0x6e8] sm:$0xff]
        %v729 = vld [vmem:[%s6 + $0x6f0] sm:$0xff]
        %v730 = vld [vmem:[%s6 + $0x6f8] sm:$0xff]
        %v731 = vld [vmem:[%s6 + $0x700] sm:$0xff]
        %v732 = vld [vmem:[%s6 + $0x708] sm:$0xff]
        %v733 = vld [vmem:[%s6 + $0x710] sm:$0xff]
        %v734 = vld [vmem:[%s6 + $0x718] sm:$0xff]
        %v735 = vld [vmem:[%s6 + $0x720] sm:$0xff]
        %v736 = vld [vmem:[%s6 + $0x728] sm:$0xff]
        %v737 = vld [vmem:[%s6 + $0x730] sm:$0xff]
        %v738 = vld [vmem:[%s6 + $0x738] sm:$0xff]
        %v739 = vld [vmem:[%s6 + $0x740] sm:$0xff]
        %v740 = vld [vmem:[%s6 + $0x748] sm:$0xff]
        %v741 = vld [vmem:[%s6 + $0x750] sm:$0xff]
        %v742 = vld [vmem:[%s6 + $0x758] sm:$0xff]
        %v743 = vld [vmem:[%s6 + $0x760] sm:$0xff]
        %v744 = vld [vmem:[%s6 + $0x768] sm:$0xff]
        %v745 = vld [vmem:[%s6 + $0x770] sm:$0xff]
        %v746 = vld [vmem:[%s6 + $0x778] sm:$0xff]
        %v747 = vld [vmem:[%s6 + $0x780] sm:$0xff]
        %v748 = vld [vmem:[%s6 + $0x788] sm:$0xff]
        %v749 = vld [vmem:[%s6 + $0x790] sm:$0xff]
        %v750 = vld [vmem:[%s6 + $0x798] sm:$0xff]
        %v751 = vld [vmem:[%s6 + $0x7a0] sm:$0xff]
        %v752 = vld [vmem:[%s6 + $0x7a8] sm:$0xff]
        %v753 = vld [vmem:[%s6 + $0x7b0] sm:$0xff]
        %v754 = vld [vmem:[%s6 + $0x7b8] sm:$0xff]
        %v755 = vld [vmem:[%s6 + $0x7c0] sm:$0xff]
        %v756 = vld [vmem:[%s6 + $0x7c8] sm:$0xff]
        %v757 = vld [vmem:[%s6 + $0x7d0] sm:$0xff]
        %v758 = vld [vmem:[%s6 + $0x7d8] sm:$0xff]
        %v759 = vld [vmem:[%s6 + $0x7e0] sm:$0xff]
        %v760 = vld [vmem:[%s6 + $0x7e8] sm:$0xff]
        %v761 = vld [vmem:[%s6 + $0x7f0] sm:$0xff]
        %v762 = vld [vmem:[%s6 + $0x7f8] sm:$0xff]
        %v763 = vld [vmem:[%s7] sm:$0x1]
        %v764 = vld [vmem:[%s473] sm:$0xff]
        %v766 = vcombine.high %v764, %v764
        %768 = vrot.lane.b32.xlu0 %v764, 17
        %v769 = vpop.permute.xlu0 %768
        %770 = vrot.lane.b32.xlu0 %v766, 17
        %v771 = vpop.permute.xlu0 %770
        %v772 = vlaneseq
        %v773 = vand.u32 %v772, 127
        %vm774 = vcmp.lt.s32.totalorder %v773, 17
        %v775 = vsel %vm774, %v769, %v771
        %v776 = vsel %vm774, %v771, %v769
        %v777 = vlaneseq
        %v778 = vshrl.u32 %v777, 7
        %v779 = vsub.s32 0, %v778
        %v780 = vrot.slane %v499, %v779
        %v781 = vlaneseq
        %v782 = vshrl.u32 %v781, 7
        %v783 = vsub.s32 0, %v782
        %v784 = vrot.slane %v500, %v783
        %v785 = vmul.f32 %v776, %v780
        %v786 = vmul.f32 %v775, %v784
        %787 = vst [vmem:[#allocation2] sm:$0xf] %v785
        %788 = vst [vmem:[#allocation2 + $0x8] sm:$0xf] %v786
        %789 = vrot.lane.b32.xlu0 %v764, 16
        %v790 = vpop.permute.xlu0 %789
        %791 = vrot.lane.b32.xlu0 %v766, 16
        %v792 = vpop.permute.xlu0 %791
        %vm793 = vcmp.lt.s32.totalorder %v773, 16
        %v794 = vsel %vm793, %v790, %v792
        %v795 = vsel %vm793, %v792, %v790
        %v796 = vlaneseq
        %v797 = vshrl.u32 %v796, 7
        %v798 = vsub.s32 1, %v797
        %v799 = vrot.slane %v499, %v798
        %v800 = vlaneseq
        %v801 = vshrl.u32 %v800, 7
        %v802 = vsub.s32 1, %v801
        %v803 = vrot.slane %v500, %v802
        %v804 = vmul.f32 %v795, %v799
        %v805 = vmul.f32 %v794, %v803
        %v808 = vrot.slane %v804, 4
        %v809 = vrot.slane %v805, 4
        %812 = vst [vmem:[#allocation2] sm:$0xf0] %v808
        %813 = vst [vmem:[#allocation2 + $0x8] sm:$0xf0] %v809
        %814 = vrot.lane.b32.xlu0 %v764, 15
        %v815 = vpop.permute.xlu0 %814
        %816 = vrot.lane.b32.xlu0 %v766, 15
        %v817 = vpop.permute.xlu0 %816
        %vm818 = vcmp.lt.s32.totalorder %v773, 15
        %v819 = vsel %vm818, %v815, %v817
        %v820 = vsel %vm818, %v817, %v815
        %v821 = vlaneseq
        %v822 = vshrl.u32 %v821, 7
        %v823 = vsub.s32 2, %v822
        %v824 = vrot.slane %v499, %v823
        %v825 = vlaneseq
        %v826 = vshrl.u32 %v825, 7
        %v827 = vsub.s32 2, %v826
        %v828 = vrot.slane %v500, %v827
        %v829 = vmul.f32 %v820, %v824
        %v830 = vmul.f32 %v819, %v828
        %831 = vst [vmem:[#allocation2 + $0x10] sm:$0xf] %v829
        %832 = vst [vmem:[#allocation2 + $0x18] sm:$0xf] %v830
        %833 = vrot.lane.b32.xlu0 %v764, 1
        %v834 = vpop.permute.xlu0 %833
        %835 = vrot.lane.b32.xlu0 %v766, 1
        %v836 = vpop.permute.xlu0 %835
        %vm837 = vcmp.lt.s32.totalorder %v773, 1
        %v838 = vsel %vm837, %v834, %v836
        %v839 = vsel %vm837, %v836, %v834
        %v840 = vlaneseq
        %v841 = vshrl.u32 %v840, 7
        %v842 = vsub.s32 3, %v841
        %v843 = vrot.slane %v499, %v842
        %v844 = vlaneseq
        %v845 = vshrl.u32 %v844, 7
        %v846 = vsub.s32 3, %v845
        %v847 = vrot.slane %v500, %v846
        %v848 = vmul.f32 %v839, %v843
        %v849 = vmul.f32 %v838, %v847
        %v852 = vrot.slane %v848, 4
        %v853 = vrot.slane %v849, 4
        %856 = vst [vmem:[#allocation2 + $0x10] sm:$0xf0] %v852
        %857 = vst [vmem:[#allocation2 + $0x18] sm:$0xf0] %v853
        %858 = vst [vmem:[#allocation2 + $0x20] sm:$0xf] %v764
        %859 = vst [vmem:[#allocation2 + $0x28] sm:$0xf] %v766
        %860 = vrot.lane.b32.xlu0 %v764, 127
        %v861 = vpop.permute.xlu0 %860
        %862 = vrot.lane.b32.xlu0 %v766, 127
        %v863 = vpop.permute.xlu0 %862
        %vm864 = vcmp.lt.s32.totalorder %v773, 127
        %v865 = vsel %vm864, %v861, %v863
        %v866 = vsel %vm864, %v863, %v861
        %v867 = vlaneseq
        %v868 = vshrl.u32 %v867, 7
        %v869 = vsub.s32 5, %v868
        %v870 = vrot.slane %v499, %v869
        %v871 = vlaneseq
        %v872 = vshrl.u32 %v871, 7
        %v873 = vsub.s32 5, %v872
        %v874 = vrot.slane %v500, %v873
        %v875 = vmul.f32 %v865, %v870
        %v876 = vmul.f32 %v866, %v874
        %v879 = vrot.slane %v875, 4
        %v880 = vrot.slane %v876, 4
        %883 = vst [vmem:[#allocation2 + $0x20] sm:$0xf0] %v879
        %884 = vst [vmem:[#allocation2 + $0x28] sm:$0xf0] %v880
        %885 = vrot.lane.b32.xlu0 %v764, 113
        %v886 = vpop.permute.xlu0 %885
        %887 = vrot.lane.b32.xlu0 %v766, 113
        %v888 = vpop.permute.xlu0 %887
        %vm889 = vcmp.lt.s32.totalorder %v773, 113
        %v890 = vsel %vm889, %v886, %v888
        %v891 = vsel %vm889, %v888, %v886
        %v892 = vlaneseq
        %v893 = vshrl.u32 %v892, 7
        %v894 = vsub.s32 6, %v893
        %v895 = vrot.slane %v499, %v894
        %v896 = vlaneseq
        %v897 = vshrl.u32 %v896, 7
        %v898 = vsub.s32 6, %v897
        %v899 = vrot.slane %v500, %v898
        %v900 = vmul.f32 %v890, %v895
        %v901 = vmul.f32 %v891, %v899
        %902 = vst [vmem:[#allocation2 + $0x30] sm:$0xf] %v900
        %903 = vst [vmem:[#allocation2 + $0x38] sm:$0xf] %v901
        %904 = vrot.lane.b32.xlu0 %v764, 112
        %v905 = vpop.permute.xlu0 %904
        %906 = vrot.lane.b32.xlu0 %v766, 112
        %v907 = vpop.permute.xlu0 %906
        %vm908 = vcmp.lt.s32.totalorder %v773, 112
        %v909 = vsel %vm908, %v905, %v907
        %v910 = vsel %vm908, %v907, %v905
        %v911 = vlaneseq
        %v912 = vshrl.u32 %v911, 7
        %v913 = vsub.s32 7, %v912
        %v914 = vrot.slane %v499, %v913
        %v915 = vlaneseq
        %v916 = vshrl.u32 %v915, 7
        %v917 = vsub.s32 7, %v916
        %v918 = vrot.slane %v500, %v917
        %v919 = vmul.f32 %v909, %v914
        %v920 = vmul.f32 %v910, %v918
        %v923 = vrot.slane %v919, 4
        %v924 = vrot.slane %v920, 4
        %927 = vst [vmem:[#allocation2 + $0x30] sm:$0xf0] %v923
        %928 = vst [vmem:[#allocation2 + $0x38] sm:$0xf0] %v924
        %929 = vrot.lane.b32.xlu0 %v764, 111
        %v930 = vpop.permute.xlu0 %929
        %931 = vrot.lane.b32.xlu0 %v766, 111
        %v932 = vpop.permute.xlu0 %931
        %vm933 = vcmp.lt.s32.totalorder %v773, 111
        %v934 = vsel %vm933, %v930, %v932
        %v935 = vsel %vm933, %v932, %v930
        %v936 = vlaneseq
        %v937 = vshrl.u32 %v936, 7
        %v938 = vsub.s32 0, %v937
        %v939 = vrot.slane %v501, %v938
        %v940 = vlaneseq
        %v941 = vshrl.u32 %v940, 7
        %v942 = vsub.s32 0, %v941
        %v943 = vrot.slane %v502, %v942
        %v944 = vmul.f32 %v934, %v939
        %v945 = vmul.f32 %v935, %v943
        %946 = vst [vmem:[#allocation2 + $0x40] sm:$0xf] %v944
        %947 = vst [vmem:[#allocation2 + $0x48] sm:$0xf] %v945
        %v948 = vld [vmem:[#allocation2] sm:$0xff]
        %v949 = vld [vmem:[#allocation2 + $0x8] sm:$0xff]
        %v950 = vld [vmem:[#allocation2 + $0x10] sm:$0xff]
        %v951 = vld [vmem:[#allocation2 + $0x18] sm:$0xff]
        %v952 = vld [vmem:[#allocation2 + $0x20] sm:$0xff]
        %v953 = vld [vmem:[#allocation2 + $0x28] sm:$0xff]
        %v954 = vld [vmem:[#allocation2 + $0x30] sm:$0xff]
        %v955 = vld [vmem:[#allocation2 + $0x38] sm:$0xff]
        %v956 = vld [vmem:[#allocation2 + $0x40] sm:$0xf]
        %v957 = vld [vmem:[#allocation2 + $0x48] sm:$0xf]
        %959 = vset.pattern.permute.xlu0 0
        %960 = vperm.xlu0 %959, %v504
        %v961 = vpop.permute.xlu0 %960
        %vm963 = vcmask 293888
        %v965 = vsel %vm963, %v503, 0
        %vm967 = vcmask 1043456
        %v969 = vsel %vm967, %v956, 0
        %v972 = vsel %vm967, %v957, 0
        %974 = vmatprep.subr.mxu0 0.0
        %975 = vmatpush1.msra.mxu0 0.0
        %976 = vmatprep.subr.mxu0 0.0
        %977 = vmatpush1.msra.mxu0 0.0
        %978 = vmatprep.subr.mxu0 0.0
        %979 = vmatpush1.msra.mxu0 0.0
        %980 = vmatprep.subr.mxu0 0.0
        %981 = vmatpush1.msra.mxu0 0.0
        %982 = vmatprep.subr.mxu0 0.0
        %983 = vmatpush1.msra.mxu0 0.0
        %984 = vmatprep.subr.mxu0 0.0
        %985 = vmatpush1.msra.mxu0 0.0
        %986 = vmatprep.subr.mxu0 0.0
        %987 = vmatpush1.msra.mxu0 0.0
        %988 = vmatprep.subr.mxu0 0.0
        %989 = vmatpush1.msra.mxu0 0.0
        %990 = vmatprep.subr.mxu0 0.0
        %991 = vmatpush1.msra.mxu0 0.0
        %992 = vmatprep.subr.mxu0 0.0
        %993 = vmatpush1.msra.mxu0 0.0
        %994 = vmatprep.subr.mxu0 0.0
        %995 = vmatpush1.msra.mxu0 0.0
        %996 = vmatprep.subr.mxu0 %v972
        %997 = vmatpush1.msra.mxu0 %v969
        %998 = vmatprep.subr.mxu0 %v955
        %999 = vmatpush1.msra.mxu0 %v954
        %1000 = vmatprep.subr.mxu0 %v953
        %1001 = vmatpush1.msra.mxu0 %v952
        %1002 = vmatprep.subr.mxu0 %v951
        %1003 = vmatpush1.msra.mxu0 %v950
        %1004 = vmatprep.subr.mxu0 %v949
        %1005 = vmatpush1.msra.mxu0 %v948
        %1006 = vmatprep.subr.mxu0 0.0
        %1007 = vmatpush2.msra.mxu0 0.0
        %1008 = vmatprep.subr.mxu0 0.0
        %1009 = vmatpush2.msra.mxu0 0.0
        %1010 = vmatprep.subr.mxu0 0.0
        %1011 = vmatpush2.msra.mxu0 0.0
        %1012 = vmatprep.subr.mxu0 0.0
        %1013 = vmatpush2.msra.mxu0 0.0
        %1014 = vmatprep.subr.mxu0 0.0
        %1015 = vmatpush2.msra.mxu0 0.0
        %1016 = vmatprep.subr.mxu0 0.0
        %1017 = vmatpush2.msra.mxu0 0.0
        %1018 = vmatprep.subr.mxu0 0.0
        %1019 = vmatpush2.msra.mxu0 0.0
        %1020 = vmatprep.subr.mxu0 0.0
        %1021 = vmatpush2.msra.mxu0 0.0
        %1022 = vmatprep.subr.mxu0 0.0
        %1023 = vmatpush2.msra.mxu0 0.0
        %1024 = vmatprep.subr.mxu0 0.0
        %1025 = vmatpush2.msra.mxu0 0.0
        %1026 = vmatprep.subr.mxu0 0.0
        %1027 = vmatpush2.msra.mxu0 0.0
        %1028 = vmatprep.subr.mxu0 0.0
        %1029 = vmatpush2.msra.mxu0 0.0
        %1030 = vmatprep.subr.mxu0 0.0
        %1031 = vmatpush2.msra.mxu0 0.0
        %1032 = vmatprep.subr.mxu0 0.0
        %1033 = vmatpush2.msra.mxu0 0.0
        %1034 = vmatprep.subr.mxu0 0.0
        %1035 = vmatpush2.msra.mxu0 0.0
        %1036 = vmatprep.subr.mxu0 0.0
        %1037 = vmatpush2.msra.mxu0 0.0
        %1038 = vmatprep.mubr.f32.mxu0 0.0
        %1039 = vmatmul.mubr.f32.gmra.mxu0 %v965
        %v1040 = vpop.f32.mrf.mxu0
        %v1041 = vadd.f32 %v961, %v1040
        %v1042 = vpop.f32.mrf.mxu0
        %v1043 = vadd.f32 %v961, %v1042
        %1044 = vdwg.mxu0
        %1045 = vst [vmem:[%s478] sm:$0xff] %v1041
        %1046 = vst [vmem:[%s478 + $0x8] sm:$0xff] %v1043
        %v1047 = vmax.f32 %v1041, 0.0
        %v1048 = vmax.f32 %v1043, 0.0
        %1049 = vst [vmem:[%s483] sm:$0xff] %v1047
        %1050 = vst [vmem:[%s483 + $0x8] sm:$0xff] %v1048
        %1051 = vrot.lane.b32.xlu0 %v1047, 17
        %v1052 = vpop.permute.xlu0 %1051
        %1053 = vrot.lane.b32.xlu0 %v1048, 17
        %v1054 = vpop.permute.xlu0 %1053
        %v1055 = vsel %vm774, %v1052, %v1054
        %v1056 = vsel %vm774, %v1054, %v1052
        %v1057 = vmul.f32 %v1056, %v780
        %v1058 = vmul.f32 %v1055, %v784
        %1059 = vst [vmem:[#allocation3] sm:$0xff] %v1057
        %1060 = vst [vmem:[#allocation3 + $0x8] sm:$0xff] %v1058
        %1061 = vrot.lane.b32.xlu0 %v1047, 16
        %v1062 = vpop.permute.xlu0 %1061
        %1063 = vrot.lane.b32.xlu0 %v1048, 16
        %v1064 = vpop.permute.xlu0 %1063
        %v1065 = vsel %vm793, %v1062, %v1064
        %v1066 = vsel %vm793, %v1064, %v1062
        %v1067 = vmul.f32 %v1066, %v799
        %v1068 = vmul.f32 %v1065, %v803
        %1069 = vst [vmem:[#allocation3 + $0x10] sm:$0xff] %v1067
        %1070 = vst [vmem:[#allocation3 + $0x18] sm:$0xff] %v1068
        %1071 = vrot.lane.b32.xlu0 %v1047, 15
        %v1072 = vpop.permute.xlu0 %1071
        %1073 = vrot.lane.b32.xlu0 %v1048, 15
        %v1074 = vpop.permute.xlu0 %1073
        %v1075 = vsel %vm818, %v1072, %v1074
        %v1076 = vsel %vm818, %v1074, %v1072
        %v1077 = vmul.f32 %v1076, %v824
        %v1078 = vmul.f32 %v1075, %v828
        %1079 = vst [vmem:[#allocation3 + $0x20] sm:$0xff] %v1077
        %1080 = vst [vmem:[#allocation3 + $0x28] sm:$0xff] %v1078
        %1081 = vrot.lane.b32.xlu0 %v1047, 1
        %v1082 = vpop.permute.xlu0 %1081
        %1083 = vrot.lane.b32.xlu0 %v1048, 1
        %v1084 = vpop.permute.xlu0 %1083
        %v1085 = vsel %vm837, %v1082, %v1084
        %v1086 = vsel %vm837, %v1084, %v1082
        %v1087 = vmul.f32 %v1086, %v843
        %v1088 = vmul.f32 %v1085, %v847
        %1089 = vst [vmem:[#allocation3 + $0x30] sm:$0xff] %v1087
        %1090 = vst [vmem:[#allocation3 + $0x38] sm:$0xff] %v1088
        %1091 = vst [vmem:[#allocation3 + $0x40] sm:$0xff] %v1047
        %1092 = vst [vmem:[#allocation3 + $0x48] sm:$0xff] %v1048
        %1093 = vrot.lane.b32.xlu0 %v1047, 127
        %v1094 = vpop.permute.xlu0 %1093
        %1095 = vrot.lane.b32.xlu0 %v1048, 127
        %v1096 = vpop.permute.xlu0 %1095
        %v1097 = vsel %vm864, %v1094, %v1096
        %v1098 = vsel %vm864, %v1096, %v1094
        %v1099 = vmul.f32 %v1097, %v870
        %v1100 = vmul.f32 %v1098, %v874
        %1101 = vst [vmem:[#allocation3 + $0x50] sm:$0xff] %v1099
        %1102 = vst [vmem:[#allocation3 + $0x58] sm:$0xff] %v1100
        %1103 = vrot.lane.b32.xlu0 %v1047, 113
        %v1104 = vpop.permute.xlu0 %1103
        %1105 = vrot.lane.b32.xlu0 %v1048, 113
        %v1106 = vpop.permute.xlu0 %1105
        %v1107 = vsel %vm889, %v1104, %v1106
        %v1108 = vsel %vm889, %v1106, %v1104
        %v1109 = vmul.f32 %v1107, %v895
        %v1110 = vmul.f32 %v1108, %v899
        %1111 = vst [vmem:[#allocation3 + $0x60] sm:$0xff] %v1109
        %1112 = vst [vmem:[#allocation3 + $0x68] sm:$0xff] %v1110
        %1113 = vrot.lane.b32.xlu0 %v1047, 112
        %v1114 = vpop.permute.xlu0 %1113
        %1115 = vrot.lane.b32.xlu0 %v1048, 112
        %v1116 = vpop.permute.xlu0 %1115
        %v1117 = vsel %vm908, %v1114, %v1116
        %v1118 = vsel %vm908, %v1116, %v1114
        %v1119 = vmul.f32 %v1117, %v914
        %v1120 = vmul.f32 %v1118, %v918
        %1121 = vst [vmem:[#allocation3 + $0x70] sm:$0xff] %v1119
        %1122 = vst [vmem:[#allocation3 + $0x78] sm:$0xff] %v1120
        %1123 = vrot.lane.b32.xlu0 %v1047, 111
        %v1124 = vpop.permute.xlu0 %1123
        %1125 = vrot.lane.b32.xlu0 %v1048, 111
        %v1126 = vpop.permute.xlu0 %1125
        %v1127 = vsel %vm933, %v1124, %v1126
        %v1128 = vsel %vm933, %v1126, %v1124
        %v1129 = vmul.f32 %v1127, %v939
        %v1130 = vmul.f32 %v1128, %v943
        %1131 = vst [vmem:[#allocation3 + $0x80] sm:$0xff] %v1129
        %1132 = vst [vmem:[#allocation3 + $0x88] sm:$0xff] %v1130
        %v1133 = vld [vmem:[#allocation3] sm:$0xff]
        %v1134 = vld [vmem:[#allocation3 + $0x8] sm:$0xff]
        %v1135 = vld [vmem:[#allocation3 + $0x10] sm:$0xff]
        %v1136 = vld [vmem:[#allocation3 + $0x18] sm:$0xff]
        %v1137 = vld [vmem:[#allocation3 + $0x20] sm:$0xff]
        %v1138 = vld [vmem:[#allocation3 + $0x28] sm:$0xff]
        %v1139 = vld [vmem:[#allocation3 + $0x30] sm:$0xff]
        %v1140 = vld [vmem:[#allocation3 + $0x38] sm:$0xff]
        %v1141 = vld [vmem:[#allocation3 + $0x40] sm:$0xff]
        %v1142 = vld [vmem:[#allocation3 + $0x48] sm:$0xff]
        %v1143 = vld [vmem:[#allocation3 + $0x50] sm:$0xff]
        %v1144 = vld [vmem:[#allocation3 + $0x58] sm:$0xff]
        %v1145 = vld [vmem:[#allocation3 + $0x60] sm:$0xff]
        %v1146 = vld [vmem:[#allocation3 + $0x68] sm:$0xff]
        %v1147 = vld [vmem:[#allocation3 + $0x70] sm:$0xff]
        %v1148 = vld [vmem:[#allocation3 + $0x78] sm:$0xff]
        %v1149 = vld [vmem:[#allocation3 + $0x80] sm:$0xff]
        %v1150 = vld [vmem:[#allocation3 + $0x88] sm:$0xff]
        %1152 = vset.pattern.permute.xlu0 0
        %1153 = vperm.xlu0 %1152, %v506
        %v1154 = vpop.permute.xlu0 %1153
        %vm1156 = vcmask 588800
        %v1158 = vsel %vm1156, %v505, 0
        %1160 = vmatprep.subr.mxu0 0.0
        %1161 = vmatpush1.msra.mxu0 0.0
        %1162 = vmatprep.subr.mxu0 0.0
        %1163 = vmatpush1.msra.mxu0 0.0
        %1164 = vmatprep.subr.mxu0 0.0
        %1165 = vmatpush1.msra.mxu0 0.0
        %1166 = vmatprep.subr.mxu0 0.0
        %1167 = vmatpush1.msra.mxu0 0.0
        %1168 = vmatprep.subr.mxu0 0.0
        %1169 = vmatpush1.msra.mxu0 0.0
        %1170 = vmatprep.subr.mxu0 0.0
        %1171 = vmatpush1.msra.mxu0 0.0
        %1172 = vmatprep.subr.mxu0 0.0
        %1173 = vmatpush1.msra.mxu0 0.0
        %1174 = vmatprep.subr.mxu0 %v1150
        %1175 = vmatpush1.msra.mxu0 %v1149
        %1176 = vmatprep.subr.mxu0 %v1148
        %1177 = vmatpush1.msra.mxu0 %v1147
        %1178 = vmatprep.subr.mxu0 %v1146
        %1179 = vmatpush1.msra.mxu0 %v1145
        %1180 = vmatprep.subr.mxu0 %v1144
        %1181 = vmatpush1.msra.mxu0 %v1143
        %1182 = vmatprep.subr.mxu0 %v1142
        %1183 = vmatpush1.msra.mxu0 %v1141
        %1184 = vmatprep.subr.mxu0 %v1140
        %1185 = vmatpush1.msra.mxu0 %v1139
        %1186 = vmatprep.subr.mxu0 %v1138
        %1187 = vmatpush1.msra.mxu0 %v1137
        %1188 = vmatprep.subr.mxu0 %v1136
        %1189 = vmatpush1.msra.mxu0 %v1135
        %1190 = vmatprep.subr.mxu0 %v1134
        %1191 = vmatpush1.msra.mxu0 %v1133
        %1192 = vmatprep.subr.mxu0 0.0
        %1193 = vmatpush2.msra.mxu0 0.0
        %1194 = vmatprep.subr.mxu0 0.0
        %1195 = vmatpush2.msra.mxu0 0.0
        %1196 = vmatprep.subr.mxu0 0.0
        %1197 = vmatpush2.msra.mxu0 0.0
        %1198 = vmatprep.subr.mxu0 0.0
        %1199 = vmatpush2.msra.mxu0 0.0
        %1200 = vmatprep.subr.mxu0 0.0
        %1201 = vmatpush2.msra.mxu0 0.0
        %1202 = vmatprep.subr.mxu0 0.0
        %1203 = vmatpush2.msra.mxu0 0.0
        %1204 = vmatprep.subr.mxu0 0.0
        %1205 = vmatpush2.msra.mxu0 0.0
        %1206 = vmatprep.subr.mxu0 0.0
        %1207 = vmatpush2.msra.mxu0 0.0
        %1208 = vmatprep.subr.mxu0 0.0
        %1209 = vmatpush2.msra.mxu0 0.0
        %1210 = vmatprep.subr.mxu0 0.0
        %1211 = vmatpush2.msra.mxu0 0.0
        %1212 = vmatprep.subr.mxu0 0.0
        %1213 = vmatpush2.msra.mxu0 0.0
        %1214 = vmatprep.subr.mxu0 0.0
        %1215 = vmatpush2.msra.mxu0 0.0
        %1216 = vmatprep.subr.mxu0 0.0
        %1217 = vmatpush2.msra.mxu0 0.0
        %1218 = vmatprep.subr.mxu0 0.0
        %1219 = vmatpush2.msra.mxu0 0.0
        %1220 = vmatprep.subr.mxu0 0.0
        %1221 = vmatpush2.msra.mxu0 0.0
        %1222 = vmatprep.subr.mxu0 0.0
        %1223 = vmatpush2.msra.mxu0 0.0
        %1224 = vmatprep.mubr.f32.mxu0 0.0
        %1225 = vmatmul.mubr.f32.gmra.mxu0 %v1158
        %v1226 = vpop.f32.mrf.mxu0
        %v1227 = vadd.f32 %v1154, %v1226
        %v1228 = vpop.f32.mrf.mxu0
        %v1229 = vadd.f32 %v1154, %v1228
        %1230 = vdwg.mxu0
        %1231 = vst [vmem:[%s488] sm:$0xff] %v1227
        %1232 = vst [vmem:[%s488 + $0x8] sm:$0xff] %v1229
        %v1233 = vadd.f32 %v1047, %v1227
        %v1234 = vadd.f32 %v1048, %v1229
        %1235 = vst [vmem:[%s493] sm:$0xff] %v1233
        %1236 = vst [vmem:[%s493 + $0x8] sm:$0xff] %v1234
        %v1237 = vmax.f32 %v1233, 0.0
        %v1238 = vmax.f32 %v1234, 0.0
        %1239 = vst [vmem:[%s498] sm:$0xff] %v1237
        %1240 = vst [vmem:[%s498 + $0x8] sm:$0xff] %v1238
        %v1243 = vrot.slane %v1237, 1
        %v1244 = vrot.slane %v1238, 1
        %v1247 = vrot.slane %v1237, 2
        %v1248 = vrot.slane %v1238, 2
        %v1251 = vrot.slane %v1237, 3
        %v1252 = vrot.slane %v1238, 3
        %v1255 = vrot.slane %v1237, 4
        %v1256 = vrot.slane %v1238, 4
        %v1259 = vrot.slane %v1237, 5
        %v1260 = vrot.slane %v1238, 5
        %v1263 = vrot.slane %v1237, 6
        %v1264 = vrot.slane %v1238, 6
        %v1267 = vrot.slane %v1237, 7
        %v1268 = vrot.slane %v1238, 7
        %1271 = vmatprep.subr.mxu0 0.0
        %1272 = vmatpush1.msra.mxu0 %v522
        %1273 = vmatprep.subr.mxu0 0.0
        %1274 = vmatpush1.msra.mxu0 %v521
        %1275 = vmatprep.subr.mxu0 0.0
        %1276 = vmatpush1.msra.mxu0 %v520
        %1277 = vmatprep.subr.mxu0 0.0
        %1278 = vmatpush1.msra.mxu0 %v519
        %1279 = vmatprep.subr.mxu0 0.0
        %1280 = vmatpush1.msra.mxu0 %v518
        %1281 = vmatprep.subr.mxu0 0.0
        %1282 = vmatpush1.msra.mxu0 %v517
        %1283 = vmatprep.subr.mxu0 0.0
        %1284 = vmatpush1.msra.mxu0 %v516
        %1285 = vmatprep.subr.mxu0 0.0
        %1286 = vmatpush1.msra.mxu0 %v515
        %1287 = vmatprep.subr.mxu0 0.0
        %1288 = vmatpush1.msra.mxu0 %v514
        %1289 = vmatprep.subr.mxu0 0.0
        %1290 = vmatpush1.msra.mxu0 %v513
        %1291 = vmatprep.subr.mxu0 0.0
        %1292 = vmatpush1.msra.mxu0 %v512
        %1293 = vmatprep.subr.mxu0 0.0
        %1294 = vmatpush1.msra.mxu0 %v511
        %1295 = vmatprep.subr.mxu0 0.0
        %1296 = vmatpush1.msra.mxu0 %v510
        %1297 = vmatprep.subr.mxu0 0.0
        %1298 = vmatpush1.msra.mxu0 %v509
        %1299 = vmatprep.subr.mxu0 0.0
        %1300 = vmatpush1.msra.mxu0 %v508
        %1301 = vmatprep.subr.mxu0 0.0
        %1302 = vmatpush1.msra.mxu0 %v507
        %1303 = vmatprep.subr.mxu0 0.0
        %1304 = vmatpush2.msra.mxu0 %v538
        %1305 = vmatprep.subr.mxu0 0.0
        %1306 = vmatpush2.msra.mxu0 %v537
        %1307 = vmatprep.subr.mxu0 0.0
        %1308 = vmatpush2.msra.mxu0 %v536
        %1309 = vmatprep.subr.mxu0 0.0
        %1310 = vmatpush2.msra.mxu0 %v535
        %1311 = vmatprep.subr.mxu0 0.0
        %1312 = vmatpush2.msra.mxu0 %v534
        %1313 = vmatprep.subr.mxu0 0.0
        %1314 = vmatpush2.msra.mxu0 %v533
        %1315 = vmatprep.subr.mxu0 0.0
        %1316 = vmatpush2.msra.mxu0 %v532
        %1317 = vmatprep.subr.mxu0 0.0
        %1318 = vmatpush2.msra.mxu0 %v531
        %1319 = vmatprep.subr.mxu0 0.0
        %1320 = vmatpush2.msra.mxu0 %v530
        %1321 = vmatprep.subr.mxu0 0.0
        %1322 = vmatpush2.msra.mxu0 %v529
        %1323 = vmatprep.subr.mxu0 0.0
        %1324 = vmatpush2.msra.mxu0 %v528
        %1325 = vmatprep.subr.mxu0 0.0
        %1326 = vmatpush2.msra.mxu0 %v527
        %1327 = vmatprep.subr.mxu0 0.0
        %1328 = vmatpush2.msra.mxu0 %v526
        %1329 = vmatprep.subr.mxu0 0.0
        %1330 = vmatpush2.msra.mxu0 %v525
        %1331 = vmatprep.subr.mxu0 0.0
        %1332 = vmatpush2.msra.mxu0 %v524
        %1333 = vmatprep.subr.mxu0 0.0
        %1334 = vmatpush2.msra.mxu0 %v523
        %1335 = vmatprep.mubr.f32.mxu0 %v1238
        %1336 = vmatmul.mubr.f32.gmra.mxu0 %v1237
        %v1337 = vpop.f32.mrf.mxu0
        %v1338 = vadd.f32 %v763, %v1337
        %v1339 = vpop.f32.mrf.mxu0
        %1340 = vdwg.mxu0
        %1341 = vmatprep.subr.mxu0 0.0
        %1342 = vmatpush1.msra.mxu0 %v554
        %1343 = vmatprep.subr.mxu0 0.0
        %1344 = vmatpush1.msra.mxu0 %v553
        %1345 = vmatprep.subr.mxu0 0.0
        %1346 = vmatpush1.msra.mxu0 %v552
        %1347 = vmatprep.subr.mxu0 0.0
        %1348 = vmatpush1.msra.mxu0 %v551
        %1349 = vmatprep.subr.mxu0 0.0
        %1350 = vmatpush1.msra.mxu0 %v550
        %1351 = vmatprep.subr.mxu0 0.0
        %1352 = vmatpush1.msra.mxu0 %v549
        %1353 = vmatprep.subr.mxu0 0.0
        %1354 = vmatpush1.msra.mxu0 %v548
        %1355 = vmatprep.subr.mxu0 0.0
        %1356 = vmatpush1.msra.mxu0 %v547
        %1357 = vmatprep.subr.mxu0 0.0
        %1358 = vmatpush1.msra.mxu0 %v546
        %1359 = vmatprep.subr.mxu0 0.0
        %1360 = vmatpush1.msra.mxu0 %v545
        %1361 = vmatprep.subr.mxu0 0.0
        %1362 = vmatpush1.msra.mxu0 %v544
        %1363 = vmatprep.subr.mxu0 0.0
        %1364 = vmatpush1.msra.mxu0 %v543
        %1365 = vmatprep.subr.mxu0 0.0
        %1366 = vmatpush1.msra.mxu0 %v542
        %1367 = vmatprep.subr.mxu0 0.0
        %1368 = vmatpush1.msra.mxu0 %v541
        %1369 = vmatprep.subr.mxu0 0.0
        %1370 = vmatpush1.msra.mxu0 %v540
        %1371 = vmatprep.subr.mxu0 0.0
        %1372 = vmatpush1.msra.mxu0 %v539
        %1373 = vmatprep.subr.mxu0 0.0
        %1374 = vmatpush2.msra.mxu0 %v570
        %1375 = vmatprep.subr.mxu0 0.0
        %1376 = vmatpush2.msra.mxu0 %v569
        %1377 = vmatprep.subr.mxu0 0.0
        %1378 = vmatpush2.msra.mxu0 %v568
        %1379 = vmatprep.subr.mxu0 0.0
        %1380 = vmatpush2.msra.mxu0 %v567
        %1381 = vmatprep.subr.mxu0 0.0
        %1382 = vmatpush2.msra.mxu0 %v566
        %1383 = vmatprep.subr.mxu0 0.0
        %1384 = vmatpush2.msra.mxu0 %v565
        %1385 = vmatprep.subr.mxu0 0.0
        %1386 = vmatpush2.msra.mxu0 %v564
        %1387 = vmatprep.subr.mxu0 0.0
        %1388 = vmatpush2.msra.mxu0 %v563
        %1389 = vmatprep.subr.mxu0 0.0
        %1390 = vmatpush2.msra.mxu0 %v562
        %1391 = vmatprep.subr.mxu0 0.0
        %1392 = vmatpush2.msra.mxu0 %v561
        %1393 = vmatprep.subr.mxu0 0.0
        %1394 = vmatpush2.msra.mxu0 %v560
        %1395 = vmatprep.subr.mxu0 0.0
        %1396 = vmatpush2.msra.mxu0 %v559
        %1397 = vmatprep.subr.mxu0 0.0
        %1398 = vmatpush2.msra.mxu0 %v558
        %1399 = vmatprep.subr.mxu0 0.0
        %1400 = vmatpush2.msra.mxu0 %v557
        %1401 = vmatprep.subr.mxu0 0.0
        %1402 = vmatpush2.msra.mxu0 %v556
        %1403 = vmatprep.subr.mxu0 0.0
        %1404 = vmatpush2.msra.mxu0 %v555
        %1405 = vmatprep.mubr.f32.mxu0 %v1244
        %1406 = vmatmul.mubr.f32.gmra.mxu0 %v1243
        %v1407 = vpop.f32.mrf.mxu0
        %v1408 = vadd.f32 %v1338, %v1407
        %v1409 = vpop.f32.mrf.mxu0
        %1410 = vdwg.mxu0
        %1411 = vmatprep.subr.mxu0 0.0
        %1412 = vmatpush1.msra.mxu0 %v586
        %1413 = vmatprep.subr.mxu0 0.0
        %1414 = vmatpush1.msra.mxu0 %v585
        %1415 = vmatprep.subr.mxu0 0.0
        %1416 = vmatpush1.msra.mxu0 %v584
        %1417 = vmatprep.subr.mxu0 0.0
        %1418 = vmatpush1.msra.mxu0 %v583
        %1419 = vmatprep.subr.mxu0 0.0
        %1420 = vmatpush1.msra.mxu0 %v582
        %1421 = vmatprep.subr.mxu0 0.0
        %1422 = vmatpush1.msra.mxu0 %v581
        %1423 = vmatprep.subr.mxu0 0.0
        %1424 = vmatpush1.msra.mxu0 %v580
        %1425 = vmatprep.subr.mxu0 0.0
        %1426 = vmatpush1.msra.mxu0 %v579
        %1427 = vmatprep.subr.mxu0 0.0
        %1428 = vmatpush1.msra.mxu0 %v578
        %1429 = vmatprep.subr.mxu0 0.0
        %1430 = vmatpush1.msra.mxu0 %v577
        %1431 = vmatprep.subr.mxu0 0.0
        %1432 = vmatpush1.msra.mxu0 %v576
        %1433 = vmatprep.subr.mxu0 0.0
        %1434 = vmatpush1.msra.mxu0 %v575
        %1435 = vmatprep.subr.mxu0 0.0
        %1436 = vmatpush1.msra.mxu0 %v574
        %1437 = vmatprep.subr.mxu0 0.0
        %1438 = vmatpush1.msra.mxu0 %v573
        %1439 = vmatprep.subr.mxu0 0.0
        %1440 = vmatpush1.msra.mxu0 %v572
        %1441 = vmatprep.subr.mxu0 0.0
        %1442 = vmatpush1.msra.mxu0 %v571
        %1443 = vmatprep.subr.mxu0 0.0
        %1444 = vmatpush2.msra.mxu0 %v602
        %1445 = vmatprep.subr.mxu0 0.0
        %1446 = vmatpush2.msra.mxu0 %v601
        %1447 = vmatprep.subr.mxu0 0.0
        %1448 = vmatpush2.msra.mxu0 %v600
        %1449 = vmatprep.subr.mxu0 0.0
        %1450 = vmatpush2.msra.mxu0 %v599
        %1451 = vmatprep.subr.mxu0 0.0
        %1452 = vmatpush2.msra.mxu0 %v598
        %1453 = vmatprep.subr.mxu0 0.0
        %1454 = vmatpush2.msra.mxu0 %v597
        %1455 = vmatprep.subr.mxu0 0.0
        %1456 = vmatpush2.msra.mxu0 %v596
        %1457 = vmatprep.subr.mxu0 0.0
        %1458 = vmatpush2.msra.mxu0 %v595
        %1459 = vmatprep.subr.mxu0 0.0
        %1460 = vmatpush2.msra.mxu0 %v594
        %1461 = vmatprep.subr.mxu0 0.0
        %1462 = vmatpush2.msra.mxu0 %v593
        %1463 = vmatprep.subr.mxu0 0.0
        %1464 = vmatpush2.msra.mxu0 %v592
        %1465 = vmatprep.subr.mxu0 0.0
        %1466 = vmatpush2.msra.mxu0 %v591
        %1467 = vmatprep.subr.mxu0 0.0
        %1468 = vmatpush2.msra.mxu0 %v590
        %1469 = vmatprep.subr.mxu0 0.0
        %1470 = vmatpush2.msra.mxu0 %v589
        %1471 = vmatprep.subr.mxu0 0.0
        %1472 = vmatpush2.msra.mxu0 %v588
        %1473 = vmatprep.subr.mxu0 0.0
        %1474 = vmatpush2.msra.mxu0 %v587
        %1475 = vmatprep.mubr.f32.mxu0 %v1248
        %1476 = vmatmul.mubr.f32.gmra.mxu0 %v1247
        %v1477 = vpop.f32.mrf.mxu0
        %v1478 = vadd.f32 %v1408, %v1477
        %v1479 = vpop.f32.mrf.mxu0
        %1480 = vdwg.mxu0
        %1481 = vmatprep.subr.mxu0 0.0
        %1482 = vmatpush1.msra.mxu0 %v618
        %1483 = vmatprep.subr.mxu0 0.0
        %1484 = vmatpush1.msra.mxu0 %v617
        %1485 = vmatprep.subr.mxu0 0.0
        %1486 = vmatpush1.msra.mxu0 %v616
        %1487 = vmatprep.subr.mxu0 0.0
        %1488 = vmatpush1.msra.mxu0 %v615
        %1489 = vmatprep.subr.mxu0 0.0
        %1490 = vmatpush1.msra.mxu0 %v614
        %1491 = vmatprep.subr.mxu0 0.0
        %1492 = vmatpush1.msra.mxu0 %v613
        %1493 = vmatprep.subr.mxu0 0.0
        %1494 = vmatpush1.msra.mxu0 %v612
        %1495 = vmatprep.subr.mxu0 0.0
        %1496 = vmatpush1.msra.mxu0 %v611
        %1497 = vmatprep.subr.mxu0 0.0
        %1498 = vmatpush1.msra.mxu0 %v610
        %1499 = vmatprep.subr.mxu0 0.0
        %1500 = vmatpush1.msra.mxu0 %v609
        %1501 = vmatprep.subr.mxu0 0.0
        %1502 = vmatpush1.msra.mxu0 %v608
        %1503 = vmatprep.subr.mxu0 0.0
        %1504 = vmatpush1.msra.mxu0 %v607
        %1505 = vmatprep.subr.mxu0 0.0
        %1506 = vmatpush1.msra.mxu0 %v606
        %1507 = vmatprep.subr.mxu0 0.0
        %1508 = vmatpush1.msra.mxu0 %v605
        %1509 = vmatprep.subr.mxu0 0.0
        %1510 = vmatpush1.msra.mxu0 %v604
        %1511 = vmatprep.subr.mxu0 0.0
        %1512 = vmatpush1.msra.mxu0 %v603
        %1513 = vmatprep.subr.mxu0 0.0
        %1514 = vmatpush2.msra.mxu0 %v634
        %1515 = vmatprep.subr.mxu0 0.0
        %1516 = vmatpush2.msra.mxu0 %v633
        %1517 = vmatprep.subr.mxu0 0.0
        %1518 = vmatpush2.msra.mxu0 %v632
        %1519 = vmatprep.subr.mxu0 0.0
        %1520 = vmatpush2.msra.mxu0 %v631
        %1521 = vmatprep.subr.mxu0 0.0
        %1522 = vmatpush2.msra.mxu0 %v630
        %1523 = vmatprep.subr.mxu0 0.0
        %1524 = vmatpush2.msra.mxu0 %v629
        %1525 = vmatprep.subr.mxu0 0.0
        %1526 = vmatpush2.msra.mxu0 %v628
        %1527 = vmatprep.subr.mxu0 0.0
        %1528 = vmatpush2.msra.mxu0 %v627
        %1529 = vmatprep.subr.mxu0 0.0
        %1530 = vmatpush2.msra.mxu0 %v626
        %1531 = vmatprep.subr.mxu0 0.0
        %1532 = vmatpush2.msra.mxu0 %v625
        %1533 = vmatprep.subr.mxu0 0.0
        %1534 = vmatpush2.msra.mxu0 %v624
        %1535 = vmatprep.subr.mxu0 0.0
        %1536 = vmatpush2.msra.mxu0 %v623
        %1537 = vmatprep.subr.mxu0 0.0
        %1538 = vmatpush2.msra.mxu0 %v622
        %1539 = vmatprep.subr.mxu0 0.0
        %1540 = vmatpush2.msra.mxu0 %v621
        %1541 = vmatprep.subr.mxu0 0.0
        %1542 = vmatpush2.msra.mxu0 %v620
        %1543 = vmatprep.subr.mxu0 0.0
        %1544 = vmatpush2.msra.mxu0 %v619
        %1545 = vmatprep.mubr.f32.mxu0 %v1252
        %1546 = vmatmul.mubr.f32.gmra.mxu0 %v1251
        %v1547 = vpop.f32.mrf.mxu0
        %v1548 = vadd.f32 %v1478, %v1547
        %v1549 = vpop.f32.mrf.mxu0
        %1550 = vdwg.mxu0
        %1551 = vmatprep.subr.mxu0 0.0
        %1552 = vmatpush1.msra.mxu0 %v650
        %1553 = vmatprep.subr.mxu0 0.0
        %1554 = vmatpush1.msra.mxu0 %v649
        %1555 = vmatprep.subr.mxu0 0.0
        %1556 = vmatpush1.msra.mxu0 %v648
        %1557 = vmatprep.subr.mxu0 0.0
        %1558 = vmatpush1.msra.mxu0 %v647
        %1559 = vmatprep.subr.mxu0 0.0
        %1560 = vmatpush1.msra.mxu0 %v646
        %1561 = vmatprep.subr.mxu0 0.0
        %1562 = vmatpush1.msra.mxu0 %v645
        %1563 = vmatprep.subr.mxu0 0.0
        %1564 = vmatpush1.msra.mxu0 %v644
        %1565 = vmatprep.subr.mxu0 0.0
        %1566 = vmatpush1.msra.mxu0 %v643
        %1567 = vmatprep.subr.mxu0 0.0
        %1568 = vmatpush1.msra.mxu0 %v642
        %1569 = vmatprep.subr.mxu0 0.0
        %1570 = vmatpush1.msra.mxu0 %v641
        %1571 = vmatprep.subr.mxu0 0.0
        %1572 = vmatpush1.msra.mxu0 %v640
        %1573 = vmatprep.subr.mxu0 0.0
        %1574 = vmatpush1.msra.mxu0 %v639
        %1575 = vmatprep.subr.mxu0 0.0
        %1576 = vmatpush1.msra.mxu0 %v638
        %1577 = vmatprep.subr.mxu0 0.0
        %1578 = vmatpush1.msra.mxu0 %v637
        %1579 = vmatprep.subr.mxu0 0.0
        %1580 = vmatpush1.msra.mxu0 %v636
        %1581 = vmatprep.subr.mxu0 0.0
        %1582 = vmatpush1.msra.mxu0 %v635
        %1583 = vmatprep.subr.mxu0 0.0
        %1584 = vmatpush2.msra.mxu0 %v666
        %1585 = vmatprep.subr.mxu0 0.0
        %1586 = vmatpush2.msra.mxu0 %v665
        %1587 = vmatprep.subr.mxu0 0.0
        %1588 = vmatpush2.msra.mxu0 %v664
        %1589 = vmatprep.subr.mxu0 0.0
        %1590 = vmatpush2.msra.mxu0 %v663
        %1591 = vmatprep.subr.mxu0 0.0
        %1592 = vmatpush2.msra.mxu0 %v662
        %1593 = vmatprep.subr.mxu0 0.0
        %1594 = vmatpush2.msra.mxu0 %v661
        %1595 = vmatprep.subr.mxu0 0.0
        %1596 = vmatpush2.msra.mxu0 %v660
        %1597 = vmatprep.subr.mxu0 0.0
        %1598 = vmatpush2.msra.mxu0 %v659
        %1599 = vmatprep.subr.mxu0 0.0
        %1600 = vmatpush2.msra.mxu0 %v658
        %1601 = vmatprep.subr.mxu0 0.0
        %1602 = vmatpush2.msra.mxu0 %v657
        %1603 = vmatprep.subr.mxu0 0.0
        %1604 = vmatpush2.msra.mxu0 %v656
        %1605 = vmatprep.subr.mxu0 0.0
        %1606 = vmatpush2.msra.mxu0 %v655
        %1607 = vmatprep.subr.mxu0 0.0
        %1608 = vmatpush2.msra.mxu0 %v654
        %1609 = vmatprep.subr.mxu0 0.0
        %1610 = vmatpush2.msra.mxu0 %v653
        %1611 = vmatprep.subr.mxu0 0.0
        %1612 = vmatpush2.msra.mxu0 %v652
        %1613 = vmatprep.subr.mxu0 0.0
        %1614 = vmatpush2.msra.mxu0 %v651
        %1615 = vmatprep.mubr.f32.mxu0 %v1256
        %1616 = vmatmul.mubr.f32.gmra.mxu0 %v1255
        %v1617 = vpop.f32.mrf.mxu0
        %v1618 = vadd.f32 %v1548, %v1617
        %v1619 = vpop.f32.mrf.mxu0
        %1620 = vdwg.mxu0
        %1621 = vmatprep.subr.mxu0 0.0
        %1622 = vmatpush1.msra.mxu0 %v682
        %1623 = vmatprep.subr.mxu0 0.0
        %1624 = vmatpush1.msra.mxu0 %v681
        %1625 = vmatprep.subr.mxu0 0.0
        %1626 = vmatpush1.msra.mxu0 %v680
        %1627 = vmatprep.subr.mxu0 0.0
        %1628 = vmatpush1.msra.mxu0 %v679
        %1629 = vmatprep.subr.mxu0 0.0
        %1630 = vmatpush1.msra.mxu0 %v678
        %1631 = vmatprep.subr.mxu0 0.0
        %1632 = vmatpush1.msra.mxu0 %v677
        %1633 = vmatprep.subr.mxu0 0.0
        %1634 = vmatpush1.msra.mxu0 %v676
        %1635 = vmatprep.subr.mxu0 0.0
        %1636 = vmatpush1.msra.mxu0 %v675
        %1637 = vmatprep.subr.mxu0 0.0
        %1638 = vmatpush1.msra.mxu0 %v674
        %1639 = vmatprep.subr.mxu0 0.0
        %1640 = vmatpush1.msra.mxu0 %v673
        %1641 = vmatprep.subr.mxu0 0.0
        %1642 = vmatpush1.msra.mxu0 %v672
        %1643 = vmatprep.subr.mxu0 0.0
        %1644 = vmatpush1.msra.mxu0 %v671
        %1645 = vmatprep.subr.mxu0 0.0
        %1646 = vmatpush1.msra.mxu0 %v670
        %1647 = vmatprep.subr.mxu0 0.0
        %1648 = vmatpush1.msra.mxu0 %v669
        %1649 = vmatprep.subr.mxu0 0.0
        %1650 = vmatpush1.msra.mxu0 %v668
        %1651 = vmatprep.subr.mxu0 0.0
        %1652 = vmatpush1.msra.mxu0 %v667
        %1653 = vmatprep.subr.mxu0 0.0
        %1654 = vmatpush2.msra.mxu0 %v698
        %1655 = vmatprep.subr.mxu0 0.0
        %1656 = vmatpush2.msra.mxu0 %v697
        %1657 = vmatprep.subr.mxu0 0.0
        %1658 = vmatpush2.msra.mxu0 %v696
        %1659 = vmatprep.subr.mxu0 0.0
        %1660 = vmatpush2.msra.mxu0 %v695
        %1661 = vmatprep.subr.mxu0 0.0
        %1662 = vmatpush2.msra.mxu0 %v694
        %1663 = vmatprep.subr.mxu0 0.0
        %1664 = vmatpush2.msra.mxu0 %v693
        %1665 = vmatprep.subr.mxu0 0.0
        %1666 = vmatpush2.msra.mxu0 %v692
        %1667 = vmatprep.subr.mxu0 0.0
        %1668 = vmatpush2.msra.mxu0 %v691
        %1669 = vmatprep.subr.mxu0 0.0
        %1670 = vmatpush2.msra.mxu0 %v690
        %1671 = vmatprep.subr.mxu0 0.0
        %1672 = vmatpush2.msra.mxu0 %v689
        %1673 = vmatprep.subr.mxu0 0.0
        %1674 = vmatpush2.msra.mxu0 %v688
        %1675 = vmatprep.subr.mxu0 0.0
        %1676 = vmatpush2.msra.mxu0 %v687
        %1677 = vmatprep.subr.mxu0 0.0
        %1678 = vmatpush2.msra.mxu0 %v686
        %1679 = vmatprep.subr.mxu0 0.0
        %1680 = vmatpush2.msra.mxu0 %v685
        %1681 = vmatprep.subr.mxu0 0.0
        %1682 = vmatpush2.msra.mxu0 %v684
        %1683 = vmatprep.subr.mxu0 0.0
        %1684 = vmatpush2.msra.mxu0 %v683
        %1685 = vmatprep.mubr.f32.mxu0 %v1260
        %1686 = vmatmul.mubr.f32.gmra.mxu0 %v1259
        %v1687 = vpop.f32.mrf.mxu0
        %v1688 = vadd.f32 %v1618, %v1687
        %v1689 = vpop.f32.mrf.mxu0
        %1690 = vdwg.mxu0
        %1691 = vmatprep.subr.mxu0 0.0
        %1692 = vmatpush1.msra.mxu0 %v714
        %1693 = vmatprep.subr.mxu0 0.0
        %1694 = vmatpush1.msra.mxu0 %v713
        %1695 = vmatprep.subr.mxu0 0.0
        %1696 = vmatpush1.msra.mxu0 %v712
        %1697 = vmatprep.subr.mxu0 0.0
        %1698 = vmatpush1.msra.mxu0 %v711
        %1699 = vmatprep.subr.mxu0 0.0
        %1700 = vmatpush1.msra.mxu0 %v710
        %1701 = vmatprep.subr.mxu0 0.0
        %1702 = vmatpush1.msra.mxu0 %v709
        %1703 = vmatprep.subr.mxu0 0.0
        %1704 = vmatpush1.msra.mxu0 %v708
        %1705 = vmatprep.subr.mxu0 0.0
        %1706 = vmatpush1.msra.mxu0 %v707
        %1707 = vmatprep.subr.mxu0 0.0
        %1708 = vmatpush1.msra.mxu0 %v706
        %1709 = vmatprep.subr.mxu0 0.0
        %1710 = vmatpush1.msra.mxu0 %v705
        %1711 = vmatprep.subr.mxu0 0.0
        %1712 = vmatpush1.msra.mxu0 %v704
        %1713 = vmatprep.subr.mxu0 0.0
        %1714 = vmatpush1.msra.mxu0 %v703
        %1715 = vmatprep.subr.mxu0 0.0
        %1716 = vmatpush1.msra.mxu0 %v702
        %1717 = vmatprep.subr.mxu0 0.0
        %1718 = vmatpush1.msra.mxu0 %v701
        %1719 = vmatprep.subr.mxu0 0.0
        %1720 = vmatpush1.msra.mxu0 %v700
        %1721 = vmatprep.subr.mxu0 0.0
        %1722 = vmatpush1.msra.mxu0 %v699
        %1723 = vmatprep.subr.mxu0 0.0
        %1724 = vmatpush2.msra.mxu0 %v730
        %1725 = vmatprep.subr.mxu0 0.0
        %1726 = vmatpush2.msra.mxu0 %v729
        %1727 = vmatprep.subr.mxu0 0.0
        %1728 = vmatpush2.msra.mxu0 %v728
        %1729 = vmatprep.subr.mxu0 0.0
        %1730 = vmatpush2.msra.mxu0 %v727
        %1731 = vmatprep.subr.mxu0 0.0
        %1732 = vmatpush2.msra.mxu0 %v726
        %1733 = vmatprep.subr.mxu0 0.0
        %1734 = vmatpush2.msra.mxu0 %v725
        %1735 = vmatprep.subr.mxu0 0.0
        %1736 = vmatpush2.msra.mxu0 %v724
        %1737 = vmatprep.subr.mxu0 0.0
        %1738 = vmatpush2.msra.mxu0 %v723
        %1739 = vmatprep.subr.mxu0 0.0
        %1740 = vmatpush2.msra.mxu0 %v722
        %1741 = vmatprep.subr.mxu0 0.0
        %1742 = vmatpush2.msra.mxu0 %v721
        %1743 = vmatprep.subr.mxu0 0.0
        %1744 = vmatpush2.msra.mxu0 %v720
        %1745 = vmatprep.subr.mxu0 0.0
        %1746 = vmatpush2.msra.mxu0 %v719
        %1747 = vmatprep.subr.mxu0 0.0
        %1748 = vmatpush2.msra.mxu0 %v718
        %1749 = vmatprep.subr.mxu0 0.0
        %1750 = vmatpush2.msra.mxu0 %v717
        %1751 = vmatprep.subr.mxu0 0.0
        %1752 = vmatpush2.msra.mxu0 %v716
        %1753 = vmatprep.subr.mxu0 0.0
        %1754 = vmatpush2.msra.mxu0 %v715
        %1755 = vmatprep.mubr.f32.mxu0 %v1264
        %1756 = vmatmul.mubr.f32.gmra.mxu0 %v1263
        %v1757 = vpop.f32.mrf.mxu0
        %v1758 = vadd.f32 %v1688, %v1757
        %v1759 = vpop.f32.mrf.mxu0
        %1760 = vdwg.mxu0
        %1761 = vmatprep.subr.mxu0 0.0
        %1762 = vmatpush1.msra.mxu0 %v746
        %1763 = vmatprep.subr.mxu0 0.0
        %1764 = vmatpush1.msra.mxu0 %v745
        %1765 = vmatprep.subr.mxu0 0.0
        %1766 = vmatpush1.msra.mxu0 %v744
        %1767 = vmatprep.subr.mxu0 0.0
        %1768 = vmatpush1.msra.mxu0 %v743
        %1769 = vmatprep.subr.mxu0 0.0
        %1770 = vmatpush1.msra.mxu0 %v742
        %1771 = vmatprep.subr.mxu0 0.0
        %1772 = vmatpush1.msra.mxu0 %v741
        %1773 = vmatprep.subr.mxu0 0.0
        %1774 = vmatpush1.msra.mxu0 %v740
        %1775 = vmatprep.subr.mxu0 0.0
        %1776 = vmatpush1.msra.mxu0 %v739
        %1777 = vmatprep.subr.mxu0 0.0
        %1778 = vmatpush1.msra.mxu0 %v738
        %1779 = vmatprep.subr.mxu0 0.0
        %1780 = vmatpush1.msra.mxu0 %v737
        %1781 = vmatprep.subr.mxu0 0.0
        %1782 = vmatpush1.msra.mxu0 %v736
        %1783 = vmatprep.subr.mxu0 0.0
        %1784 = vmatpush1.msra.mxu0 %v735
        %1785 = vmatprep.subr.mxu0 0.0
        %1786 = vmatpush1.msra.mxu0 %v734
        %1787 = vmatprep.subr.mxu0 0.0
        %1788 = vmatpush1.msra.mxu0 %v733
        %1789 = vmatprep.subr.mxu0 0.0
        %1790 = vmatpush1.msra.mxu0 %v732
        %1791 = vmatprep.subr.mxu0 0.0
        %1792 = vmatpush1.msra.mxu0 %v731
        %1793 = vmatprep.subr.mxu0 0.0
        %1794 = vmatpush2.msra.mxu0 %v762
        %1795 = vmatprep.subr.mxu0 0.0
        %1796 = vmatpush2.msra.mxu0 %v761
        %1797 = vmatprep.subr.mxu0 0.0
        %1798 = vmatpush2.msra.mxu0 %v760
        %1799 = vmatprep.subr.mxu0 0.0
        %1800 = vmatpush2.msra.mxu0 %v759
        %1801 = vmatprep.subr.mxu0 0.0
        %1802 = vmatpush2.msra.mxu0 %v758
        %1803 = vmatprep.subr.mxu0 0.0
        %1804 = vmatpush2.msra.mxu0 %v757
        %1805 = vmatprep.subr.mxu0 0.0
        %1806 = vmatpush2.msra.mxu0 %v756
        %1807 = vmatprep.subr.mxu0 0.0
        %1808 = vmatpush2.msra.mxu0 %v755
        %1809 = vmatprep.subr.mxu0 0.0
        %1810 = vmatpush2.msra.mxu0 %v754
        %1811 = vmatprep.subr.mxu0 0.0
        %1812 = vmatpush2.msra.mxu0 %v753
        %1813 = vmatprep.subr.mxu0 0.0
        %1814 = vmatpush2.msra.mxu0 %v752
        %1815 = vmatprep.subr.mxu0 0.0
        %1816 = vmatpush2.msra.mxu0 %v751
        %1817 = vmatprep.subr.mxu0 0.0
        %1818 = vmatpush2.msra.mxu0 %v750
        %1819 = vmatprep.subr.mxu0 0.0
        %1820 = vmatpush2.msra.mxu0 %v749
        %1821 = vmatprep.subr.mxu0 0.0
        %1822 = vmatpush2.msra.mxu0 %v748
        %1823 = vmatprep.subr.mxu0 0.0
        %1824 = vmatpush2.msra.mxu0 %v747
        %1825 = vmatprep.mubr.f32.mxu0 %v1268
        %1826 = vmatmul.mubr.f32.gmra.mxu0 %v1267
        %v1827 = vpop.f32.mrf.mxu0
        %v1828 = vadd.f32 %v1758, %v1827
        %v1829 = vpop.f32.mrf.mxu0
        %1830 = vdwg.mxu0
        %vm1831 = vcmask 253952
        %1832 = vst.msk [vmem:[%s468] sm:$0x1] %vm1831, %v1828
        %p1833 = scmp.lt.s32.totalorder %s28, 1
        %s1834 = scalar_select %p1833, %s28, 1
        %s1835 = smul.addr %s1834, 2
        %s1836 = smul.addr %s1835, 8
        %s1837 = scalar_lea.vmem %s8, %s1836
        %p1838 = scmp.lt.s32.totalorder %s28, 1
        %s1839 = scalar_select %p1838, %s28, 1
        %s1840 = smul.addr %s1839, 2
        %s1841 = smul.addr %s1840, 8
        %s1842 = scalar_lea.vmem %s9, %s1841
        %p1843 = scmp.lt.s32.totalorder %s28, 1
        %s1844 = scalar_select %p1843, %s28, 1
        %s1845 = smul.addr %s1844, 2
        %s1846 = smul.addr %s1845, 8
        %s1847 = scalar_lea.vmem %s10, %s1846
        %p1848 = scmp.lt.s32.totalorder %s28, 1
        %s1849 = scalar_select %p1848, %s28, 1
        %s1850 = smul.addr %s1849, 2
        %s1851 = smul.addr %s1850, 8
        %s1852 = scalar_lea.vmem %s11, %s1851
        %p1853 = scmp.lt.s32.totalorder %s28, 1
        %s1854 = scalar_select %p1853, %s28, 1
        %s1855 = smul.addr %s1854, 2
        %s1856 = smul.addr %s1855, 8
        %s1857 = scalar_lea.vmem %s12, %s1856
        %s1858 = sand.u32 %s339, 1
        %s1859 = scalar_lea.sflag [#allocation5], %s1858
        %s1860 = sand.u32 %s339, 1
        %s1861 = scalar_lea.vmem [#allocation4], %s1860
        // Predicated region
        $region53: #{network_forward.1} parent=51 // pred_check
          %p1862 = pneg %p219
        $region54: #{network_forward.1} parent=51 // pred_check_branch
          %1864 = sbr.rel (%p1862) target = $region56
        $region55: #{network_forward.1} parent=51 // pred_region
          _
        $region56: #{network_forward.1} parent=51 // pred_fallthru
          _
        // Predicated region
        $region57: #{network_forward.1} parent=51 // pred_check
          %p1865 = pneg %p245
        $region58: #{network_forward.1} parent=51 // pred_check_branch
          %1867 = sbr.rel (%p1865) target = $region60
        $region59: #{network_forward.1} parent=51 // pred_region
          _
        $region60: #{network_forward.1} parent=51 // pred_fallthru
          _
        // Predicated region
        $region61: #{network_forward.1} parent=51 // pred_check
          %p1868 = pneg %p271
        $region62: #{network_forward.1} parent=51 // pred_check_branch
          %1870 = sbr.rel (%p1868) target = $region64
        $region63: #{network_forward.1} parent=51 // pred_region
          _
        $region64: #{network_forward.1} parent=51 // pred_fallthru
          _
        // Predicated region
        $region65: #{network_forward.1} parent=51 // pred_check
          %p1871 = pneg %p297
        $region66: #{network_forward.1} parent=51 // pred_check_branch
          %1873 = sbr.rel (%p1871) target = $region68
        $region67: #{network_forward.1} parent=51 // pred_region
          _
        $region68: #{network_forward.1} parent=51 // pred_fallthru
          _
        // Predicated region
        $region69: #{network_forward.1} parent=51 // pred_check
          %p1874 = pneg %p323
        $region70: #{network_forward.1} parent=51 // pred_check_branch
          %1876 = sbr.rel (%p1874) target = $region72
        $region71: #{network_forward.1} parent=51 // pred_region
          _
        $region72: #{network_forward.1} parent=51 // pred_fallthru
          _
        // Predicated region
        $region73: #{network_forward.1} parent=51 // pred_check
          %p1877 = pneg %p349
        $region74: #{network_forward.1} parent=51 // pred_check_branch
          %1879 = sbr.rel (%p1877) target = $region76
        $region75: #{network_forward.1} parent=51 // pred_region
          %s1881 = ssub.s32 16, 16
          %1882 = vsyncadd %s1859, %s1881
          %s1883 = smul.addr %s28, 16
          %s1884 = scalar_lea.hbm %s13, %s1883
          %s1886 = sshll.u32 %s1861, 4
          %s1887 = int_to_ptr.vmem [resolvable:$true] %s1886
          %1889 = dma.vmem_to_hbm [thread:$0]  %s1887, 16, %s1884, %s1859
        $region76: #{network_forward.1} parent=51 // pred_fallthru
          _
      $region52: #{network_forward.1} parent=5 // pred_fallthru
        _
      %p1890 = scmp.le.s32.totalorder 2, %s23
      // Predicated region
      $region77: #{network_forward.1} parent=5 // pred_check
        %p1891 = pneg %p1890
      $region78: #{network_forward.1} parent=5 // pred_check_branch
        %1893 = sbr.rel (%p1891) target = $region80
      $region79: #{network_forward.1} parent=5 // pred_region
        %s1894 = ssub.s32 %s23, 2
        // Predicated region
        $region81: #{network_forward.1} parent=79 // pred_check
          %p1895 = pneg %p225
        $region82: #{network_forward.1} parent=79 // pred_check_branch
          %1897 = sbr.rel (%p1895) target = $region84
        $region83: #{network_forward.1} parent=79 // pred_region
          %p1898 = scmp.lt.s32.totalorder %s29, 1
          %s1899 = scalar_select %p1898, %s29, 1
          %s1900 = smul.addr %s1899, 2
          %s1901 = smul.addr %s1900, 8
          %s1902 = scalar_lea.vmem %s8, %s1901
        $region84: #{network_forward.1} parent=79 // pred_fallthru
          _
        // Predicated region
        $region85: #{network_forward.1} parent=79 // pred_check
          %p1903 = pneg %p251
        $region86: #{network_forward.1} parent=79 // pred_check_branch
          %1905 = sbr.rel (%p1903) target = $region88
        $region87: #{network_forward.1} parent=79 // pred_region
          %p1906 = scmp.lt.s32.totalorder %s29, 1
          %s1907 = scalar_select %p1906, %s29, 1
          %s1908 = smul.addr %s1907, 2
          %s1909 = smul.addr %s1908, 8
          %s1910 = scalar_lea.vmem %s9, %s1909
        $region88: #{network_forward.1} parent=79 // pred_fallthru
          _
        // Predicated region
        $region89: #{network_forward.1} parent=79 // pred_check
          %p1911 = pneg %p277
        $region90: #{network_forward.1} parent=79 // pred_check_branch
          %1913 = sbr.rel (%p1911) target = $region92
        $region91: #{network_forward.1} parent=79 // pred_region
          %p1914 = scmp.lt.s32.totalorder %s29, 1
          %s1915 = scalar_select %p1914, %s29, 1
          %s1916 = smul.addr %s1915, 2
          %s1917 = smul.addr %s1916, 8
          %s1918 = scalar_lea.vmem %s10, %s1917
        $region92: #{network_forward.1} parent=79 // pred_fallthru
          _
        // Predicated region
        $region93: #{network_forward.1} parent=79 // pred_check
          %p1919 = pneg %p303
        $region94: #{network_forward.1} parent=79 // pred_check_branch
          %1921 = sbr.rel (%p1919) target = $region96
        $region95: #{network_forward.1} parent=79 // pred_region
          %p1922 = scmp.lt.s32.totalorder %s29, 1
          %s1923 = scalar_select %p1922, %s29, 1
          %s1924 = smul.addr %s1923, 2
          %s1925 = smul.addr %s1924, 8
          %s1926 = scalar_lea.vmem %s11, %s1925
        $region96: #{network_forward.1} parent=79 // pred_fallthru
          _
        // Predicated region
        $region97: #{network_forward.1} parent=79 // pred_check
          %p1927 = pneg %p329
        $region98: #{network_forward.1} parent=79 // pred_check_branch
          %1929 = sbr.rel (%p1927) target = $region100
        $region99: #{network_forward.1} parent=79 // pred_region
          %p1930 = scmp.lt.s32.totalorder %s29, 1
          %s1931 = scalar_select %p1930, %s29, 1
          %s1932 = smul.addr %s1931, 2
          %s1933 = smul.addr %s1932, 8
          %s1934 = scalar_lea.vmem %s12, %s1933
        $region100: #{network_forward.1} parent=79 // pred_fallthru
          _
        // Predicated region
        $region101: #{network_forward.1} parent=79 // pred_check
          %p1935 = pneg %p355
        $region102: #{network_forward.1} parent=79 // pred_check_branch
          %1937 = sbr.rel (%p1935) target = $region104
        $region103: #{network_forward.1} parent=79 // pred_region
          %s1938 = sand.u32 %s340, 1
          %s1939 = scalar_lea.sflag [#allocation5], %s1938
          %s1940 = sand.u32 %s340, 1
          %s1941 = scalar_lea.vmem [#allocation4], %s1940
          %1942 = dma.done %s1939, 16
        $region104: #{network_forward.1} parent=79 // pred_fallthru
          _
      $region80: #{network_forward.1} parent=5 // pred_fallthru
        _
    $region6: #{network_forward.1} parent=1 // loop_footer
      %s27 = sadd.s32 1, %s23
    $region7: #{network_forward.1} parent=1 // loop_footer_branch
      %22 = sbr.rel target = $region3
    $region8: #{network_forward.1} parent=1 // loop_exit
      _
    %1943 = vsyncpa [#allocation5], 1
    %s1944 = scalar_lea.sflag [#allocation5], 1
    %1945 = vsyncpa %s1944, 1

</llo_original>
